<compile_context>
chip_gen: v5e
topology: v5e:2x2
jax: 0.10.0
libtpu: 0.0.40
codegen_flags: <defaults>
</compile_context>

<pallas_src>
import jax
import jax.numpy as jnp
from jax.experimental import pallas as pl
from jax.experimental.pallas import tpu as pltpu


def _round_up(x, m):
    return (x + m - 1) // m * m


def _decoder_kernel(x_ref, wmu_ref, bmu_ref, wlv_ref, blv_ref,
                    loc_ref, scale_ref):
    """One batch tile of the two linear heads + softplus.

    x_ref:            (TB, F)  activation tile (pipelined)
    wmu_ref/wlv_ref:  (F, L)   head weights (VMEM-resident, constant index_map)
    bmu_ref/blv_ref:  (1, L)   head biases  (VMEM-resident)
    loc_ref:          (TB, L)  mu output
    scale_ref:        (TB, L)  softplus(logvar) output
    """
    x = x_ref[...]

    # mu head: matmul (f32 accumulate) + bias, written straight out.
    mu = jnp.dot(x, wmu_ref[...], preferred_element_type=jnp.float32)
    loc_ref[...] = (mu + bmu_ref[...]).astype(loc_ref.dtype)

    # logvar head: matmul + bias + numerically-stable softplus (EUP exp/log),
    # only over the L lanes that are actually needed.
    lv = jnp.dot(x, wlv_ref[...], preferred_element_type=jnp.float32)
    scale_ref[...] = jnp.logaddexp(lv + blv_ref[...], 0.0).astype(scale_ref.dtype)


def _normal_dist_decoder_xla(x, w_mu, b_mu, w_lv, b_lv):
    loc = x @ w_mu + b_mu
    scale = jnp.logaddexp(x @ w_lv + b_lv, 0.0)
    return loc, scale


def normal_dist_decoder(x, w_mu, b_mu, w_lv, b_lv, *, block_b=2048,
                        out_dtype=None, min_pallas_rows=1024):
    """x: (B, F); w_*: (F, L) (pre-transposed nn.Linear weights); b_*: (L,).

    Returns (loc, scale), each (B, L): the parameters of
    Normal(mu(X), softplus(logvar(X))).

    out_dtype: optionally jnp.bfloat16 to halve the output HBM stream
    (precision trade-off, opt-in).  Matmul operands / accumulation stay f32.
    """
    B, F = x.shape
    L = w_mu.shape[1]
    out_dtype = x.dtype if out_dtype is None else out_dtype

    # Small / mid batches: fixed pallas_call + DMA setup cost (several us)
    # beats the kernel at ~4*F*L FLOPs per row; let XLA fuse it.
    if B < min_pallas_rows:
        loc, scale = _normal_dist_decoder_xla(x, w_mu, b_mu, w_lv, b_lv)
        return loc.astype(out_dtype), scale.astype(out_dtype)

    itemsize_in = jnp.dtype(x.dtype).itemsize
    itemsize_out = jnp.dtype(out_dtype).itemsize

    # ---- batch tile: large (amortize ~0.35us/step) but always >= 4 grid steps
    # so v7x's two TensorCores both get work and pipelining stays active.
    target_steps = 4
    tb = min(block_b, max(8, _round_up(pl.cdiv(B, target_steps), 8)))

    # ---- explicit VMEM working-set bound (v7x: 64 MiB physical, 32 MiB scoped
    # default is the binding constraint; weights may be double-buffered too).
    def _working_set(tb_):
        return (2 * tb_ * F * itemsize_in               # X, double-buffered
                + 2 * tb_ * 2 * L * itemsize_out        # loc+scale, double-buffered
                + 2 * (2 * F * L + 2 * L) * 4)          # resident weights/biases
    vmem_budget = 16 * 1024 * 1024
    while tb > 8 and _working_set(tb) > vmem_budget:
        tb = max(8, _round_up(tb // 2, 8))

    grid = (pl.cdiv(B, tb),)

    bmu = b_mu.reshape(1, L).astype(jnp.float32)
    blv = b_lv.reshape(1, L).astype(jnp.float32)

    cost = pl.CostEstimate(
        flops=2 * B * F * (2 * L) + 4 * B * L,
        transcendentals=2 * B * L,                      # exp + log per softplus elem
        bytes_accessed=(B * F * itemsize_in
                        + 2 * F * L * 4 + 2 * L * 4
                        + 2 * B * L * itemsize_out),
    )

    loc, scale = pl.pallas_call(
        _decoder_kernel,
        out_shape=(jax.ShapeDtypeStruct((B, L), out_dtype),
                   jax.ShapeDtypeStruct((B, L), out_dtype)),
        grid_spec=pltpu.PrefetchScalarGridSpec(
            num_scalar_prefetch=0,
            grid=grid,
            in_specs=[
                pl.BlockSpec((tb, F), lambda i: (i, 0)),   # X tile (pipelined)
                pl.BlockSpec((F, L), lambda i: (0, 0)),    # W_mu (resident)
                pl.BlockSpec((1, L), lambda i: (0, 0)),    # b_mu (resident)
                pl.BlockSpec((F, L), lambda i: (0, 0)),    # W_logvar (resident)
                pl.BlockSpec((1, L), lambda i: (0, 0)),    # b_logvar (resident)
            ],
            out_specs=[
                pl.BlockSpec((tb, L), lambda i: (i, 0)),   # loc
                pl.BlockSpec((tb, L), lambda i: (i, 0)),   # scale
            ],
        ),
        compiler_params=pltpu.CompilerParams(
            dimension_semantics=("parallel",),   # megacore sharding on v7x
        ),
        cost_estimate=cost,
    )(x, w_mu, bmu, w_lv, blv)

    return loc, scale


if __name__ == "__main__":
    num_feat_in = 32
    latentD = 16

    key = jax.random.PRNGKey(0)
    kx, kwm, kbm, kwl, kbl, kx2 = jax.random.split(key, 6)

    # nn.Linear weight is (out, in); we store it transposed (in, out) for X @ W.
    bound = 1.0 / (num_feat_in ** 0.5)
    w_mu = jax.random.uniform(kwm, (num_feat_in, latentD),
                              minval=-bound, maxval=bound, dtype=jnp.float32)
    b_mu = jax.random.uniform(kbm, (latentD,),
                              minval=-bound, maxval=bound, dtype=jnp.float32)
    w_lv = jax.random.uniform(kwl, (num_feat_in, latentD),
                              minval=-bound, maxval=bound, dtype=jnp.float32)
    b_lv = jax.random.uniform(kbl, (latentD,),
                              minval=-bound, maxval=bound, dtype=jnp.float32)

    # ---- Pallas path: batch large enough to beat the launch-overhead
    # crossover; block_b=2048 capped to 4 grid steps of tb=512.
    batch = 2048
    x = jax.random.normal(kx, (batch, num_feat_in), dtype=jnp.float32)
    ref_loc, ref_scale = _normal_dist_decoder_xla(x, w_mu, b_mu, w_lv, b_lv)

    loc, scale = normal_dist_decoder(x, w_mu, b_mu, w_lv, b_lv)
    jax.block_until_ready((loc, scale))
    assert loc.shape == (batch, latentD) and scale.shape == (batch, latentD)
    assert jnp.allclose(loc, ref_loc, atol=1e-5, rtol=1e-5)
    assert jnp.allclose(scale, ref_scale, atol=1e-5, rtol=1e-5)
    assert bool(jnp.all(scale > 0))

    # ---- opt-in bf16 output stream (halves output HBM traffic).
    loc16, scale16 = normal_dist_decoder(x, w_mu, b_mu, w_lv, b_lv,
                                         out_dtype=jnp.bfloat16)
    jax.block_until_ready((loc16, scale16))
    assert jnp.allclose(loc16.astype(jnp.float32), ref_loc, atol=2e-2, rtol=2e-2)
    assert jnp.allclose(scale16.astype(jnp.float32), ref_scale, atol=2e-2, rtol=2e-2)

    # ---- small batch: goes through the XLA fallback (below crossover).
    x_small = jax.random.normal(kx2, (8, num_feat_in), dtype=jnp.float32)
    sref_loc, sref_scale = _normal_dist_decoder_xla(x_small, w_mu, b_mu, w_lv, b_lv)
    sloc, sscale = normal_dist_decoder(x_small, w_mu, b_mu, w_lv, b_lv)
    jax.block_until_ready((sloc, sscale))
    assert jnp.allclose(sloc, sref_loc, atol=1e-6, rtol=1e-6)
    assert jnp.allclose(sscale, sref_scale, atol=1e-6, rtol=1e-6)

    print("KERNEL_OK")
</pallas_src>

<mosaic_0001>
module attributes {stable_mosaic.version = 11 : i64} {
  func.func @_decoder_kernel(%arg0: i32, %arg1: memref<512x32xf32, #tpu.memory_space<vmem>>, %arg2: memref<32x16xf32, #tpu.memory_space<vmem>>, %arg3: memref<1x16xf32, #tpu.memory_space<vmem>>, %arg4: memref<32x16xf32, #tpu.memory_space<vmem>>, %arg5: memref<1x16xf32, #tpu.memory_space<vmem>>, %arg6: memref<512x16xf32, #tpu.memory_space<vmem>>, %arg7: memref<512x16xf32, #tpu.memory_space<vmem>>) attributes {dimension_semantics = [#tpu.dimension_semantics<parallel>], iteration_bounds = array<i64: 4>, scalar_prefetch = 0 : i64, scratch_operands = 0 : i64, tpu.core_type = #tpu.core_type<tc>, window_params = [{transform_indices = @transform_0, window_bounds = array<i64: 512, 32>}, {pipeline_mode = #tpu.pipeline_mode<synchronous>, transform_indices = @transform_1, window_bounds = array<i64: 32, 16>}, {pipeline_mode = #tpu.pipeline_mode<synchronous>, transform_indices = @transform_2, window_bounds = array<i64: 1, 16>}, {pipeline_mode = #tpu.pipeline_mode<synchronous>, transform_indices = @transform_3, window_bounds = array<i64: 32, 16>}, {pipeline_mode = #tpu.pipeline_mode<synchronous>, transform_indices = @transform_4, window_bounds = array<i64: 1, 16>}, {transform_indices = @transform_5, window_bounds = array<i64: 512, 16>}, {transform_indices = @transform_6, window_bounds = array<i64: 512, 16>}]} {
    %c0 = arith.constant 0 : index
    %c0_0 = arith.constant 0 : index
    %0 = vector.load %arg1[%c0, %c0_0] : memref<512x32xf32, #tpu.memory_space<vmem>>, vector<512x32xf32>
    %c0_1 = arith.constant 0 : index
    %c0_2 = arith.constant 0 : index
    %1 = vector.load %arg2[%c0_1, %c0_2] : memref<32x16xf32, #tpu.memory_space<vmem>>, vector<32x16xf32>
    %cst = arith.constant dense<0.000000e+00> : vector<512x16xf32>
    %2 = tpu.matmul %0, %1, %cst {dimension_numbers = #tpu.dot_dimension_numbers<[1], [0], [0], [1], [0, 0, 1, 1], [], []>} : vector<512x32xf32>, vector<32x16xf32>, vector<512x16xf32> -> vector<512x16xf32>
    %c0_3 = arith.constant 0 : index
    %c0_4 = arith.constant 0 : index
    %3 = vector.load %arg3[%c0_3, %c0_4] : memref<1x16xf32, #tpu.memory_space<vmem>>, vector<1x16xf32>
    %4 = vector.broadcast %3 : vector<1x16xf32> to vector<512x16xf32>
    %5 = arith.addf %2, %4 : vector<512x16xf32>
    %c0_5 = arith.constant 0 : index
    %c0_6 = arith.constant 0 : index
    %6 = vector.load %arg6[%c0_5, %c0_6] : memref<512x16xf32, #tpu.memory_space<vmem>>, vector<512x16xf32>
    tpu.vector_store %arg6[%c0_5, %c0_6], %5 {strides = array<i32>} : memref<512x16xf32, #tpu.memory_space<vmem>>, vector<512x16xf32>,
    %c0_7 = arith.constant 0 : index
    %c0_8 = arith.constant 0 : index
    %7 = vector.load %arg4[%c0_7, %c0_8] : memref<32x16xf32, #tpu.memory_space<vmem>>, vector<32x16xf32>
    %cst_9 = arith.constant dense<0.000000e+00> : vector<512x16xf32>
    %8 = tpu.matmul %0, %7, %cst_9 {dimension_numbers = #tpu.dot_dimension_numbers<[1], [0], [0], [1], [0, 0, 1, 1], [], []>} : vector<512x32xf32>, vector<32x16xf32>, vector<512x16xf32> -> vector<512x16xf32>
    %c0_10 = arith.constant 0 : index
    %c0_11 = arith.constant 0 : index
    %9 = vector.load %arg5[%c0_10, %c0_11] : memref<1x16xf32, #tpu.memory_space<vmem>>, vector<1x16xf32>
    %10 = vector.broadcast %9 : vector<1x16xf32> to vector<512x16xf32>
    %11 = arith.addf %8, %10 : vector<512x16xf32>
    %cst_12 = arith.constant 0.000000e+00 : f32
    %12 = vector.broadcast %cst_12 : f32 to vector<512x16xf32>
    %13 = arith.maximumf %11, %12 : vector<512x16xf32>
    %14 = vector.broadcast %cst_12 : f32 to vector<512x16xf32>
    %15 = arith.subf %11, %14 : vector<512x16xf32>
    %16 = arith.cmpf one, %15, %15 : vector<512x16xf32>
    %17 = vector.broadcast %cst_12 : f32 to vector<512x16xf32>
    %18 = arith.addf %11, %17 : vector<512x16xf32>
    %19 = math.absf %15 : vector<512x16xf32>
    %cst_13 = arith.constant 0.000000e+00 : f32
    %20 = vector.broadcast %cst_13 : f32 to vector<512x16xf32>
    %21 = arith.subf %20, %19 : vector<512x16xf32>
    %22 = math.exp %21 : vector<512x16xf32>
    %23 = math.log1p %22 : vector<512x16xf32>
    %24 = arith.addf %13, %23 : vector<512x16xf32>
    %25 = arith.select %16, %18, %24 : vector<512x16xi1>, vector<512x16xf32>
    %c0_14 = arith.constant 0 : index
    %c0_15 = arith.constant 0 : index
    %26 = vector.load %arg7[%c0_14, %c0_15] : memref<512x16xf32, #tpu.memory_space<vmem>>, vector<512x16xf32>
    tpu.vector_store %arg7[%c0_14, %c0_15], %25 {strides = array<i32>} : memref<512x16xf32, #tpu.memory_space<vmem>>, vector<512x16xf32>,
    return
  }
  func.func @transform_0(%arg0: i32) -> (i32, i32) {
    %c0_i32 = arith.constant 0 : i32
    %c0_i32_0 = arith.constant 0 : i32
    return %arg0, %c0_i32 : i32, i32
  }
  func.func @transform_1(%arg0: i32) -> (i32, i32) {
    %c0_i32 = arith.constant 0 : i32
    %c0_i32_0 = arith.constant 0 : i32
    %c0_i32_1 = arith.constant 0 : i32
    return %c0_i32, %c0_i32_0 : i32, i32
  }
  func.func @transform_2(%arg0: i32) -> (i32, i32) {
    %c0_i32 = arith.constant 0 : i32
    %c0_i32_0 = arith.constant 0 : i32
    %c0_i32_1 = arith.constant 0 : i32
    return %c0_i32, %c0_i32_0 : i32, i32
  }
  func.func @transform_3(%arg0: i32) -> (i32, i32) {
    %c0_i32 = arith.constant 0 : i32
    %c0_i32_0 = arith.constant 0 : i32
    %c0_i32_1 = arith.constant 0 : i32
    return %c0_i32, %c0_i32_0 : i32, i32
  }
  func.func @transform_4(%arg0: i32) -> (i32, i32) {
    %c0_i32 = arith.constant 0 : i32
    %c0_i32_0 = arith.constant 0 : i32
    %c0_i32_1 = arith.constant 0 : i32
    return %c0_i32, %c0_i32_0 : i32, i32
  }
  func.func @transform_5(%arg0: i32) -> (i32, i32) {
    %c0_i32 = arith.constant 0 : i32
    %c0_i32_0 = arith.constant 0 : i32
    return %arg0, %c0_i32 : i32, i32
  }
  func.func @transform_6(%arg0: i32) -> (i32, i32) {
    %c0_i32 = arith.constant 0 : i32
    %c0_i32_0 = arith.constant 0 : i32
    return %arg0, %c0_i32 : i32, i32
  }
}

</mosaic_0001>

<llo_original>
// kernel: tpu_custom_call.1
$region0: #{tpu_custom_call.1}
  #allocation0 [shape = 'u32[]', space=smem, size = 0x4, offset = 0x4, fixed_abs, tag = 'smem constant byte address 0x4 - core index']
  #allocation1 [shape = 'u32[72,128]{1,0:T(1,128)}', space=vmem, size = 0x9000, scoped, tag = 'internal scratch']
  %s0 = inlined_call_operand.vmem [shape: f32[2048,32], index: 0, kind: input, shape index: {}]
  %s1 = inlined_call_operand.vmem [shape: f32[32,16], index: 1, kind: input, shape index: {}]
  %s2 = inlined_call_operand.vmem [shape: f32[1,16], index: 2, kind: input, shape index: {}]
  %s3 = inlined_call_operand.vmem [shape: f32[32,16], index: 3, kind: input, shape index: {}]
  %s4 = inlined_call_operand.vmem [shape: f32[1,16], index: 4, kind: input, shape index: {}]
  %s5 = inlined_call_operand.vmem [shape: f32[2048,16], index: 5, kind: output, shape index: {0}]
  %s6 = inlined_call_operand.vmem [shape: f32[2048,16], index: 6, kind: output, shape index: {1}]
  %7 = xla_tuple %s5, %s6
  %s8 = sld [smem:[#allocation0]]
  $region61: #{tpu_custom_call.1} parent=0
    _
  %s10 = ssub.s32 1, %s8
  %s11 = scalar_select 0, %s10, %s8
  loop: start=0, step=1, limit=6
  $region2: #{tpu_custom_call.1} parent=0 // loop_pre_header
    _
  $region3: #{tpu_custom_call.1} parent=0 // loop_header
    %s13 = sphi 0, %s17
    %p14 = scmp.ge.s32.totalorder %s13, 6
    %s23 = sphi 0, %s25
    %s26 = sphi 0, %s23
    %s27 = sphi 0, %s26
    %s43 = sphi 0, %s27
    %s47 = sphi 0, %s47
    %s49 = sphi 0, %s47
    %s50 = sphi 0, %s49
    %s64 = sphi 0, %s50
    %s68 = sphi 0, %s68
    %s70 = sphi 0, %s68
    %s71 = sphi 0, %s70
    %s85 = sphi 0, %s71
    %s89 = sphi 0, %s89
    %s91 = sphi 0, %s89
    %s92 = sphi 0, %s91
    %s106 = sphi 0, %s92
    %s110 = sphi 0, %s110
    %s112 = sphi 0, %s110
    %s113 = sphi 0, %s112
    %s127 = sphi 0, %s113
    %s133 = sphi 0, %s135
    %s136 = sphi 0, %s133
    %s137 = sphi 0, %s136
    %s153 = sphi 0, %s137
    %s159 = sphi 0, %s161
    %s162 = sphi 0, %s159
    %s163 = sphi 0, %s162
    %s179 = sphi 0, %s163
  $region4: #{tpu_custom_call.1} parent=0 // loop_header_branch
    %16 = sbr.rel (%p14) target = $region8
  $region5: #{tpu_custom_call.1} parent=0 // loop_body
    %s18 = ssub.s32 %s13, 1
    %s19 = ssub.s32 %s13, 2
    %s20 = sadd.s32 %s13, 1
    %s21 = ssub.s32 %s13, %s20
    %p22 = scmp.eq.s32.totalorder %s21, 0
    %s24 = sadd.s32 %s23, 1
    %s25 = scalar_select %p22, %s23, %s24
    %p28 = pneg %p22
    %p29 = scmp.eq.s32.totalorder %s13, 3
    %p30 = por %p28, %p29
    %p31 = scmp.ne.s32.totalorder %s23, %s26
    %p32 = scmp.eq.s32.totalorder %s13, 0
    %p33 = por %p31, %p32
    %p34 = scmp.ne.s32.totalorder %s23, %s26
    %p35 = scmp.eq.s32.totalorder %s18, 3
    %p36 = por %p34, %p35
    %p37 = scmp.ne.s32.totalorder %s26, %s27
    %p38 = scmp.eq.s32.totalorder %s18, 0
    %p39 = por %p37, %p38
    %p40 = scmp.ne.s32.totalorder %s26, %s27
    %p41 = scmp.eq.s32.totalorder %s19, 3
    %p42 = por %p40, %p41
    %p44 = scmp.ne.s32.totalorder %s27, %s43
    %p45 = scmp.eq.s32.totalorder %s19, 0
    %p46 = por %p44, %p45
    %s48 = sadd.s32 %s47, 1
    %p51 = scmp.eq.s32.totalorder %s13, 3
    %p52 = scmp.ne.s32.totalorder %s47, %s49
    %p53 = scmp.eq.s32.totalorder %s13, 0
    %p54 = por %p52, %p53
    %p55 = scmp.ne.s32.totalorder %s47, %s49
    %p56 = scmp.eq.s32.totalorder %s18, 3
    %p57 = por %p55, %p56
    %p58 = scmp.ne.s32.totalorder %s49, %s50
    %p59 = scmp.eq.s32.totalorder %s18, 0
    %p60 = por %p58, %p59
    %p61 = scmp.ne.s32.totalorder %s49, %s50
    %p62 = scmp.eq.s32.totalorder %s19, 3
    %p63 = por %p61, %p62
    %p65 = scmp.ne.s32.totalorder %s50, %s64
    %p66 = scmp.eq.s32.totalorder %s19, 0
    %p67 = por %p65, %p66
    %s69 = sadd.s32 %s68, 1
    %p72 = scmp.eq.s32.totalorder %s13, 3
    %p73 = scmp.ne.s32.totalorder %s68, %s70
    %p74 = scmp.eq.s32.totalorder %s13, 0
    %p75 = por %p73, %p74
    %p76 = scmp.ne.s32.totalorder %s68, %s70
    %p77 = scmp.eq.s32.totalorder %s18, 3
    %p78 = por %p76, %p77
    %p79 = scmp.ne.s32.totalorder %s70, %s71
    %p80 = scmp.eq.s32.totalorder %s18, 0
    %p81 = por %p79, %p80
    %p82 = scmp.ne.s32.totalorder %s70, %s71
    %p83 = scmp.eq.s32.totalorder %s19, 3
    %p84 = por %p82, %p83
    %p86 = scmp.ne.s32.totalorder %s71, %s85
    %p87 = scmp.eq.s32.totalorder %s19, 0
    %p88 = por %p86, %p87
    %s90 = sadd.s32 %s89, 1
    %p93 = scmp.eq.s32.totalorder %s13, 3
    %p94 = scmp.ne.s32.totalorder %s89, %s91
    %p95 = scmp.eq.s32.totalorder %s13, 0
    %p96 = por %p94, %p95
    %p97 = scmp.ne.s32.totalorder %s89, %s91
    %p98 = scmp.eq.s32.totalorder %s18, 3
    %p99 = por %p97, %p98
    %p100 = scmp.ne.s32.totalorder %s91, %s92
    %p101 = scmp.eq.s32.totalorder %s18, 0
    %p102 = por %p100, %p101
    %p103 = scmp.ne.s32.totalorder %s91, %s92
    %p104 = scmp.eq.s32.totalorder %s19, 3
    %p105 = por %p103, %p104
    %p107 = scmp.ne.s32.totalorder %s92, %s106
    %p108 = scmp.eq.s32.totalorder %s19, 0
    %p109 = por %p107, %p108
    %s111 = sadd.s32 %s110, 1
    %p114 = scmp.eq.s32.totalorder %s13, 3
    %p115 = scmp.ne.s32.totalorder %s110, %s112
    %p116 = scmp.eq.s32.totalorder %s13, 0
    %p117 = por %p115, %p116
    %p118 = scmp.ne.s32.totalorder %s110, %s112
    %p119 = scmp.eq.s32.totalorder %s18, 3
    %p120 = por %p118, %p119
    %p121 = scmp.ne.s32.totalorder %s112, %s113
    %p122 = scmp.eq.s32.totalorder %s18, 0
    %p123 = por %p121, %p122
    %p124 = scmp.ne.s32.totalorder %s112, %s113
    %p125 = scmp.eq.s32.totalorder %s19, 3
    %p126 = por %p124, %p125
    %p128 = scmp.ne.s32.totalorder %s113, %s127
    %p129 = scmp.eq.s32.totalorder %s19, 0
    %p130 = por %p128, %p129
    %s131 = ssub.s32 %s13, %s20
    %p132 = scmp.eq.s32.totalorder %s131, 0
    %s134 = sadd.s32 %s133, 1
    %s135 = scalar_select %p132, %s133, %s134
    %p138 = pneg %p132
    %p139 = scmp.eq.s32.totalorder %s13, 3
    %p140 = por %p138, %p139
    %p141 = scmp.ne.s32.totalorder %s133, %s136
    %p142 = scmp.eq.s32.totalorder %s13, 0
    %p143 = por %p141, %p142
    %p144 = scmp.ne.s32.totalorder %s133, %s136
    %p145 = scmp.eq.s32.totalorder %s18, 3
    %p146 = por %p144, %p145
    %p147 = scmp.ne.s32.totalorder %s136, %s137
    %p148 = scmp.eq.s32.totalorder %s18, 0
    %p149 = por %p147, %p148
    %p150 = scmp.ne.s32.totalorder %s136, %s137
    %p151 = scmp.eq.s32.totalorder %s19, 3
    %p152 = por %p150, %p151
    %p154 = scmp.ne.s32.totalorder %s137, %s153
    %p155 = scmp.eq.s32.totalorder %s19, 0
    %p156 = por %p154, %p155
    %s157 = ssub.s32 %s13, %s20
    %p158 = scmp.eq.s32.totalorder %s157, 0
    %s160 = sadd.s32 %s159, 1
    %s161 = scalar_select %p158, %s159, %s160
    %p164 = pneg %p158
    %p165 = scmp.eq.s32.totalorder %s13, 3
    %p166 = por %p164, %p165
    %p167 = scmp.ne.s32.totalorder %s159, %s162
    %p168 = scmp.eq.s32.totalorder %s13, 0
    %p169 = por %p167, %p168
    %p170 = scmp.ne.s32.totalorder %s159, %s162
    %p171 = scmp.eq.s32.totalorder %s18, 3
    %p172 = por %p170, %p171
    %p173 = scmp.ne.s32.totalorder %s162, %s163
    %p174 = scmp.eq.s32.totalorder %s18, 0
    %p175 = por %p173, %p174
    %p176 = scmp.ne.s32.totalorder %s162, %s163
    %p177 = scmp.eq.s32.totalorder %s19, 3
    %p178 = por %p176, %p177
    %p180 = scmp.ne.s32.totalorder %s163, %s179
    %p181 = scmp.eq.s32.totalorder %s19, 0
    %p182 = por %p180, %p181
    %p183 = scmp.le.s32.totalorder 1, %s13
    %p184 = scmp.lt.s32.totalorder %s13, 5
    %p185 = pnand %p183, %p184
    %p186 = pneg %p185
    // Predicated region
    $region9: #{tpu_custom_call.1} parent=5 // pred_check
      _
    $region10: #{tpu_custom_call.1} parent=5 // pred_check_branch
      %188 = sbr.rel (%p185) target = $region12
    $region11: #{tpu_custom_call.1} parent=5 // pred_region
      %s189 = ssub.s32 %s13, 1
      // Predicated region
      $region13: #{tpu_custom_call.1} parent=11 // pred_check
        %p190 = pneg %p60
      $region14: #{tpu_custom_call.1} parent=11 // pred_check_branch
        %192 = sbr.rel (%p190) target = $region16
      $region15: #{tpu_custom_call.1} parent=11 // pred_region
        _
      $region16: #{tpu_custom_call.1} parent=11 // pred_fallthru
        _
      // Predicated region
      $region17: #{tpu_custom_call.1} parent=11 // pred_check
        %p193 = pneg %p81
      $region18: #{tpu_custom_call.1} parent=11 // pred_check_branch
        %195 = sbr.rel (%p193) target = $region20
      $region19: #{tpu_custom_call.1} parent=11 // pred_region
        _
      $region20: #{tpu_custom_call.1} parent=11 // pred_fallthru
        _
      // Predicated region
      $region21: #{tpu_custom_call.1} parent=11 // pred_check
        %p196 = pneg %p102
      $region22: #{tpu_custom_call.1} parent=11 // pred_check_branch
        %198 = sbr.rel (%p196) target = $region24
      $region23: #{tpu_custom_call.1} parent=11 // pred_region
        _
      $region24: #{tpu_custom_call.1} parent=11 // pred_fallthru
        _
      // Predicated region
      $region25: #{tpu_custom_call.1} parent=11 // pred_check
        %p199 = pneg %p123
      $region26: #{tpu_custom_call.1} parent=11 // pred_check_branch
        %201 = sbr.rel (%p199) target = $region28
      $region27: #{tpu_custom_call.1} parent=11 // pred_region
        _
      $region28: #{tpu_custom_call.1} parent=11 // pred_fallthru
        _
    $region12: #{tpu_custom_call.1} parent=5 // pred_fallthru
      _
    %p202 = scmp.lt.s32.totalorder %s13, 4
    // Predicated region
    $region29: #{tpu_custom_call.1} parent=5 // pred_check
      %p203 = pneg %p202
    $region30: #{tpu_custom_call.1} parent=5 // pred_check_branch
      %205 = sbr.rel (%p203) target = $region32
    $region31: #{tpu_custom_call.1} parent=5 // pred_region
      // Predicated region
      $region33: #{tpu_custom_call.1} parent=31 // pred_check
        %p206 = pneg %p33
      $region34: #{tpu_custom_call.1} parent=31 // pred_check_branch
        %208 = sbr.rel (%p206) target = $region36
      $region35: #{tpu_custom_call.1} parent=31 // pred_region
        %s209 = smul.u32 64, %s13
        %p210 = scmp.lt.s32.totalorder %s209, 255
        %s211 = scalar_select %p210, %s209, 255
        %s212 = smul.addr %s211, 8
        %s213 = scalar_lea.vmem %s0, %s212
        %s214 = smul.u32 64, %s13
      $region36: #{tpu_custom_call.1} parent=31 // pred_fallthru
        _
    $region32: #{tpu_custom_call.1} parent=5 // pred_fallthru
      _
    %p215 = scmp.le.s32.totalorder 1, %s13
    %p216 = scmp.lt.s32.totalorder %s13, 5
    %p217 = pnand %p215, %p216
    %p218 = pneg %p217
    // Predicated region
    $region37: #{tpu_custom_call.1} parent=5 // pred_check
      _
    $region38: #{tpu_custom_call.1} parent=5 // pred_check_branch
      %220 = sbr.rel (%p217) target = $region40
    $region39: #{tpu_custom_call.1} parent=5 // pred_region
      %s221 = ssub.s32 %s13, 1
      %s222 = smul.u32 64, %s18
      %p223 = scmp.lt.s32.totalorder %s222, 255
      %s224 = scalar_select %p223, %s222, 255
      %s225 = smul.addr %s224, 8
      %s226 = scalar_lea.vmem %s0, %s225
      %p227 = pneg %p39
      %p228 = pneg %p36
      %p229 = pneg %p60
      %p230 = pneg %p57
      %p231 = pneg %p81
      %p232 = pneg %p78
      %p233 = pneg %p102
      %p234 = pneg %p99
      %p235 = pneg %p123
      %p236 = pneg %p120
      %p237 = pneg %p149
      %p238 = pneg %p146
      %s239 = smul.u32 64, %s18
      %p240 = scmp.lt.s32.totalorder %s239, 255
      %s241 = scalar_select %p240, %s239, 255
      %s242 = smul.addr %s241, 8
      %s243 = scalar_lea.vmem %s5, %s242
      %p244 = pneg %p175
      %p245 = pneg %p172
      %s246 = smul.u32 64, %s18
      %p247 = scmp.lt.s32.totalorder %s246, 255
      %s248 = scalar_select %p247, %s246, 255
      %s249 = smul.addr %s248, 8
      %s250 = scalar_lea.vmem %s6, %s249
      %s251 = smul.u32 64, %s18
      %p252 = scmp.lt.s32.totalorder %s251, 255
      %s253 = scalar_select %p252, %s251, 255
      %s254 = smul.addr %s253, 8
      %s255 = scalar_lea.vmem %s0, %s254
      %s256 = smul.u32 64, %s18
      %s257 = smul.u32 64, %s18
      %p258 = scmp.lt.s32.totalorder %s257, 255
      %s259 = scalar_select %p258, %s257, 255
      %s260 = smul.addr %s259, 8
      %s261 = scalar_lea.vmem %s5, %s260
      %s262 = smul.u32 64, %s18
      %s263 = smul.u32 64, %s18
      %p264 = scmp.lt.s32.totalorder %s263, 255
      %s265 = scalar_select %p264, %s263, 255
      %s266 = smul.addr %s265, 8
      %s267 = scalar_lea.vmem %s6, %s266
      %s268 = smul.u32 64, %s18
      %v269 = vld [vmem:[%s255] sm:$0xff]
      %v270 = vld [vmem:[%s255 + $0x8] sm:$0xff]
      %v271 = vld [vmem:[%s255 + $0x10] sm:$0xff]
      %v272 = vld [vmem:[%s255 + $0x18] sm:$0xff]
      %v273 = vld [vmem:[%s255 + $0x20] sm:$0xff]
      %v274 = vld [vmem:[%s255 + $0x28] sm:$0xff]
      %v275 = vld [vmem:[%s255 + $0x30] sm:$0xff]
      %v276 = vld [vmem:[%s255 + $0x38] sm:$0xff]
      %v277 = vld [vmem:[%s255 + $0x40] sm:$0xff]
      %v278 = vld [vmem:[%s255 + $0x48] sm:$0xff]
      %v279 = vld [vmem:[%s255 + $0x50] sm:$0xff]
      %v280 = vld [vmem:[%s255 + $0x58] sm:$0xff]
      %v281 = vld [vmem:[%s255 + $0x60] sm:$0xff]
      %v282 = vld [vmem:[%s255 + $0x68] sm:$0xff]
      %v283 = vld [vmem:[%s255 + $0x70] sm:$0xff]
      %v284 = vld [vmem:[%s255 + $0x78] sm:$0xff]
      %v285 = vld [vmem:[%s255 + $0x80] sm:$0xff]
      %v286 = vld [vmem:[%s255 + $0x88] sm:$0xff]
      %v287 = vld [vmem:[%s255 + $0x90] sm:$0xff]
      %v288 = vld [vmem:[%s255 + $0x98] sm:$0xff]
      %v289 = vld [vmem:[%s255 + $0xa0] sm:$0xff]
      %v290 = vld [vmem:[%s255 + $0xa8] sm:$0xff]
      %v291 = vld [vmem:[%s255 + $0xb0] sm:$0xff]
      %v292 = vld [vmem:[%s255 + $0xb8] sm:$0xff]
      %v293 = vld [vmem:[%s255 + $0xc0] sm:$0xff]
      %v294 = vld [vmem:[%s255 + $0xc8] sm:$0xff]
      %v295 = vld [vmem:[%s255 + $0xd0] sm:$0xff]
      %v296 = vld [vmem:[%s255 + $0xd8] sm:$0xff]
      %v297 = vld [vmem:[%s255 + $0xe0] sm:$0xff]
      %v298 = vld [vmem:[%s255 + $0xe8] sm:$0xff]
      %v299 = vld [vmem:[%s255 + $0xf0] sm:$0xff]
      %v300 = vld [vmem:[%s255 + $0xf8] sm:$0xff]
      %v301 = vld [vmem:[%s255 + $0x100] sm:$0xff]
      %v302 = vld [vmem:[%s255 + $0x108] sm:$0xff]
      %v303 = vld [vmem:[%s255 + $0x110] sm:$0xff]
      %v304 = vld [vmem:[%s255 + $0x118] sm:$0xff]
      %v305 = vld [vmem:[%s255 + $0x120] sm:$0xff]
      %v306 = vld [vmem:[%s255 + $0x128] sm:$0xff]
      %v307 = vld [vmem:[%s255 + $0x130] sm:$0xff]
      %v308 = vld [vmem:[%s255 + $0x138] sm:$0xff]
      %v309 = vld [vmem:[%s255 + $0x140] sm:$0xff]
      %v310 = vld [vmem:[%s255 + $0x148] sm:$0xff]
      %v311 = vld [vmem:[%s255 + $0x150] sm:$0xff]
      %v312 = vld [vmem:[%s255 + $0x158] sm:$0xff]
      %v313 = vld [vmem:[%s255 + $0x160] sm:$0xff]
      %v314 = vld [vmem:[%s255 + $0x168] sm:$0xff]
      %v315 = vld [vmem:[%s255 + $0x170] sm:$0xff]
      %v316 = vld [vmem:[%s255 + $0x178] sm:$0xff]
      %v317 = vld [vmem:[%s255 + $0x180] sm:$0xff]
      %v318 = vld [vmem:[%s255 + $0x188] sm:$0xff]
      %v319 = vld [vmem:[%s255 + $0x190] sm:$0xff]
      %v320 = vld [vmem:[%s255 + $0x198] sm:$0xff]
      %v321 = vld [vmem:[%s255 + $0x1a0] sm:$0xff]
      %v322 = vld [vmem:[%s255 + $0x1a8] sm:$0xff]
      %v323 = vld [vmem:[%s255 + $0x1b0] sm:$0xff]
      %v324 = vld [vmem:[%s255 + $0x1b8] sm:$0xff]
      %v325 = vld [vmem:[%s255 + $0x1c0] sm:$0xff]
      %v326 = vld [vmem:[%s255 + $0x1c8] sm:$0xff]
      %v327 = vld [vmem:[%s255 + $0x1d0] sm:$0xff]
      %v328 = vld [vmem:[%s255 + $0x1d8] sm:$0xff]
      %v329 = vld [vmem:[%s255 + $0x1e0] sm:$0xff]
      %v330 = vld [vmem:[%s255 + $0x1e8] sm:$0xff]
      %v331 = vld [vmem:[%s255 + $0x1f0] sm:$0xff]
      %v332 = vld [vmem:[%s255 + $0x1f8] sm:$0xff]
      %v333 = vld [vmem:[%s1] sm:$0xff]
      %v334 = vld [vmem:[%s1 + $0x8] sm:$0xff]
      %v335 = vld [vmem:[%s1 + $0x10] sm:$0xff]
      %v336 = vld [vmem:[%s1 + $0x18] sm:$0xff]
      %v337 = vld [vmem:[%s2] sm:$0x1]
      %v339 = vperm.slane %v337, 0
      %vm341 = vcmask 261120
      %v343 = vsel %vm341, %v269, 0
      %v346 = vsel %vm341, %v270, 0
      %v349 = vsel %vm341, %v271, 0
      %v352 = vsel %vm341, %v272, 0
      %v355 = vsel %vm341, %v273, 0
      %v358 = vsel %vm341, %v274, 0
      %v361 = vsel %vm341, %v275, 0
      %v364 = vsel %vm341, %v276, 0
      %v367 = vsel %vm341, %v277, 0
      %v370 = vsel %vm341, %v278, 0
      %v373 = vsel %vm341, %v279, 0
      %v376 = vsel %vm341, %v280, 0
      %v379 = vsel %vm341, %v281, 0
      %v382 = vsel %vm341, %v282, 0
      %v385 = vsel %vm341, %v283, 0
      %v388 = vsel %vm341, %v284, 0
      %v391 = vsel %vm341, %v285, 0
      %v394 = vsel %vm341, %v286, 0
      %v397 = vsel %vm341, %v287, 0
      %v400 = vsel %vm341, %v288, 0
      %v403 = vsel %vm341, %v289, 0
      %v406 = vsel %vm341, %v290, 0
      %v409 = vsel %vm341, %v291, 0
      %v412 = vsel %vm341, %v292, 0
      %v415 = vsel %vm341, %v293, 0
      %v418 = vsel %vm341, %v294, 0
      %v421 = vsel %vm341, %v295, 0
      %v424 = vsel %vm341, %v296, 0
      %v427 = vsel %vm341, %v297, 0
      %v430 = vsel %vm341, %v298, 0
      %v433 = vsel %vm341, %v299, 0
      %v436 = vsel %vm341, %v300, 0
      %v439 = vsel %vm341, %v301, 0
      %v442 = vsel %vm341, %v302, 0
      %v445 = vsel %vm341, %v303, 0
      %v448 = vsel %vm341, %v304, 0
      %v451 = vsel %vm341, %v305, 0
      %v454 = vsel %vm341, %v306, 0
      %v457 = vsel %vm341, %v307, 0
      %v460 = vsel %vm341, %v308, 0
      %v463 = vsel %vm341, %v309, 0
      %v466 = vsel %vm341, %v310, 0
      %v469 = vsel %vm341, %v311, 0
      %v472 = vsel %vm341, %v312, 0
      %v475 = vsel %vm341, %v313, 0
      %v478 = vsel %vm341, %v314, 0
      %v481 = vsel %vm341, %v315, 0
      %v484 = vsel %vm341, %v316, 0
      %v487 = vsel %vm341, %v317, 0
      %v490 = vsel %vm341, %v318, 0
      %v493 = vsel %vm341, %v319, 0
      %v496 = vsel %vm341, %v320, 0
      %v499 = vsel %vm341, %v321, 0
      %v502 = vsel %vm341, %v322, 0
      %v505 = vsel %vm341, %v323, 0
      %v508 = vsel %vm341, %v324, 0
      %v511 = vsel %vm341, %v325, 0
      %v514 = vsel %vm341, %v326, 0
      %v517 = vsel %vm341, %v327, 0
      %v520 = vsel %vm341, %v328, 0
      %v523 = vsel %vm341, %v329, 0
      %v526 = vsel %vm341, %v330, 0
      %v529 = vsel %vm341, %v331, 0
      %v532 = vsel %vm341, %v332, 0
      %534 = vmatpush.msra.mxu0 0.0
      %535 = vmatpush.msra.mxu0 0.0
      %536 = vmatpush.msra.mxu0 0.0
      %537 = vmatpush.msra.mxu0 0.0
      %538 = vmatpush.msra.mxu0 0.0
      %539 = vmatpush.msra.mxu0 0.0
      %540 = vmatpush.msra.mxu0 0.0
      %541 = vmatpush.msra.mxu0 0.0
      %542 = vmatpush.msra.mxu0 0.0
      %543 = vmatpush.msra.mxu0 0.0
      %544 = vmatpush.msra.mxu0 0.0
      %545 = vmatpush.msra.mxu0 0.0
      %546 = vmatpush.msra.mxu0 %v336
      %547 = vmatpush.msra.mxu0 %v335
      %548 = vmatpush.msra.mxu0 %v334
      %549 = vmatpush.msra.mxu0 %v333
      %550 = vmatmul.f32.gmra.mxu0 %v343
      %v551 = vpop.f32.mrf.mxu0
      %v552 = vadd.f32 %v339, %v551
      %553 = vmatmul.f32.gmra.mxu0 %v346
      %v554 = vpop.f32.mrf.mxu0
      %v555 = vadd.f32 %v339, %v554
      %556 = vmatmul.f32.gmra.mxu0 %v349
      %v557 = vpop.f32.mrf.mxu0
      %v558 = vadd.f32 %v339, %v557
      %559 = vmatmul.f32.gmra.mxu0 %v352
      %v560 = vpop.f32.mrf.mxu0
      %v561 = vadd.f32 %v339, %v560
      %562 = vmatmul.f32.gmra.mxu0 %v355
      %v563 = vpop.f32.mrf.mxu0
      %v564 = vadd.f32 %v339, %v563
      %565 = vmatmul.f32.gmra.mxu0 %v358
      %v566 = vpop.f32.mrf.mxu0
      %v567 = vadd.f32 %v339, %v566
      %568 = vmatmul.f32.gmra.mxu0 %v361
      %v569 = vpop.f32.mrf.mxu0
      %v570 = vadd.f32 %v339, %v569
      %571 = vmatmul.f32.gmra.mxu0 %v364
      %v572 = vpop.f32.mrf.mxu0
      %v573 = vadd.f32 %v339, %v572
      %574 = vmatmul.f32.gmra.mxu0 %v367
      %v575 = vpop.f32.mrf.mxu0
      %v576 = vadd.f32 %v339, %v575
      %577 = vmatmul.f32.gmra.mxu0 %v370
      %v578 = vpop.f32.mrf.mxu0
      %v579 = vadd.f32 %v339, %v578
      %580 = vmatmul.f32.gmra.mxu0 %v373
      %v581 = vpop.f32.mrf.mxu0
      %v582 = vadd.f32 %v339, %v581
      %583 = vmatmul.f32.gmra.mxu0 %v376
      %v584 = vpop.f32.mrf.mxu0
      %v585 = vadd.f32 %v339, %v584
      %586 = vmatmul.f32.gmra.mxu0 %v379
      %v587 = vpop.f32.mrf.mxu0
      %v588 = vadd.f32 %v339, %v587
      %589 = vmatmul.f32.gmra.mxu0 %v382
      %v590 = vpop.f32.mrf.mxu0
      %v591 = vadd.f32 %v339, %v590
      %592 = vmatmul.f32.gmra.mxu0 %v385
      %v593 = vpop.f32.mrf.mxu0
      %v594 = vadd.f32 %v339, %v593
      %595 = vmatmul.f32.gmra.mxu0 %v388
      %v596 = vpop.f32.mrf.mxu0
      %v597 = vadd.f32 %v339, %v596
      %598 = vmatmul.f32.gmra.mxu0 %v391
      %v599 = vpop.f32.mrf.mxu0
      %v600 = vadd.f32 %v339, %v599
      %601 = vmatmul.f32.gmra.mxu0 %v394
      %v602 = vpop.f32.mrf.mxu0
      %v603 = vadd.f32 %v339, %v602
      %604 = vmatmul.f32.gmra.mxu0 %v397
      %v605 = vpop.f32.mrf.mxu0
      %v606 = vadd.f32 %v339, %v605
      %607 = vmatmul.f32.gmra.mxu0 %v400
      %v608 = vpop.f32.mrf.mxu0
      %v609 = vadd.f32 %v339, %v608
      %610 = vmatmul.f32.gmra.mxu0 %v403
      %v611 = vpop.f32.mrf.mxu0
      %v612 = vadd.f32 %v339, %v611
      %613 = vmatmul.f32.gmra.mxu0 %v406
      %v614 = vpop.f32.mrf.mxu0
      %v615 = vadd.f32 %v339, %v614
      %616 = vmatmul.f32.gmra.mxu0 %v409
      %v617 = vpop.f32.mrf.mxu0
      %v618 = vadd.f32 %v339, %v617
      %619 = vmatmul.f32.gmra.mxu0 %v412
      %v620 = vpop.f32.mrf.mxu0
      %v621 = vadd.f32 %v339, %v620
      %622 = vmatmul.f32.gmra.mxu0 %v415
      %v623 = vpop.f32.mrf.mxu0
      %v624 = vadd.f32 %v339, %v623
      %625 = vmatmul.f32.gmra.mxu0 %v418
      %v626 = vpop.f32.mrf.mxu0
      %v627 = vadd.f32 %v339, %v626
      %628 = vmatmul.f32.gmra.mxu0 %v421
      %v629 = vpop.f32.mrf.mxu0
      %v630 = vadd.f32 %v339, %v629
      %631 = vmatmul.f32.gmra.mxu0 %v424
      %v632 = vpop.f32.mrf.mxu0
      %v633 = vadd.f32 %v339, %v632
      %634 = vmatmul.f32.gmra.mxu0 %v427
      %v635 = vpop.f32.mrf.mxu0
      %v636 = vadd.f32 %v339, %v635
      %637 = vmatmul.f32.gmra.mxu0 %v430
      %v638 = vpop.f32.mrf.mxu0
      %v639 = vadd.f32 %v339, %v638
      %640 = vmatmul.f32.gmra.mxu0 %v433
      %v641 = vpop.f32.mrf.mxu0
      %v642 = vadd.f32 %v339, %v641
      %643 = vmatmul.f32.gmra.mxu0 %v436
      %v644 = vpop.f32.mrf.mxu0
      %v645 = vadd.f32 %v339, %v644
      %646 = vmatmul.f32.gmra.mxu0 %v439
      %v647 = vpop.f32.mrf.mxu0
      %v648 = vadd.f32 %v339, %v647
      %649 = vmatmul.f32.gmra.mxu0 %v442
      %v650 = vpop.f32.mrf.mxu0
      %v651 = vadd.f32 %v339, %v650
      %652 = vmatmul.f32.gmra.mxu0 %v445
      %v653 = vpop.f32.mrf.mxu0
      %v654 = vadd.f32 %v339, %v653
      %655 = vmatmul.f32.gmra.mxu0 %v448
      %v656 = vpop.f32.mrf.mxu0
      %v657 = vadd.f32 %v339, %v656
      %658 = vmatmul.f32.gmra.mxu0 %v451
      %v659 = vpop.f32.mrf.mxu0
      %v660 = vadd.f32 %v339, %v659
      %661 = vmatmul.f32.gmra.mxu0 %v454
      %v662 = vpop.f32.mrf.mxu0
      %v663 = vadd.f32 %v339, %v662
      %664 = vmatmul.f32.gmra.mxu0 %v457
      %v665 = vpop.f32.mrf.mxu0
      %v666 = vadd.f32 %v339, %v665
      %667 = vmatmul.f32.gmra.mxu0 %v460
      %v668 = vpop.f32.mrf.mxu0
      %v669 = vadd.f32 %v339, %v668
      %670 = vmatmul.f32.gmra.mxu0 %v463
      %v671 = vpop.f32.mrf.mxu0
      %v672 = vadd.f32 %v339, %v671
      %673 = vmatmul.f32.gmra.mxu0 %v466
      %v674 = vpop.f32.mrf.mxu0
      %v675 = vadd.f32 %v339, %v674
      %676 = vmatmul.f32.gmra.mxu0 %v469
      %v677 = vpop.f32.mrf.mxu0
      %v678 = vadd.f32 %v339, %v677
      %679 = vmatmul.f32.gmra.mxu0 %v472
      %v680 = vpop.f32.mrf.mxu0
      %v681 = vadd.f32 %v339, %v680
      %682 = vmatmul.f32.gmra.mxu0 %v475
      %v683 = vpop.f32.mrf.mxu0
      %v684 = vadd.f32 %v339, %v683
      %685 = vmatmul.f32.gmra.mxu0 %v478
      %v686 = vpop.f32.mrf.mxu0
      %v687 = vadd.f32 %v339, %v686
      %688 = vmatmul.f32.gmra.mxu0 %v481
      %v689 = vpop.f32.mrf.mxu0
      %v690 = vadd.f32 %v339, %v689
      %691 = vmatmul.f32.gmra.mxu0 %v484
      %v692 = vpop.f32.mrf.mxu0
      %v693 = vadd.f32 %v339, %v692
      %694 = vmatmul.f32.gmra.mxu0 %v487
      %v695 = vpop.f32.mrf.mxu0
      %v696 = vadd.f32 %v339, %v695
      %697 = vmatmul.f32.gmra.mxu0 %v490
      %v698 = vpop.f32.mrf.mxu0
      %v699 = vadd.f32 %v339, %v698
      %700 = vmatmul.f32.gmra.mxu0 %v493
      %v701 = vpop.f32.mrf.mxu0
      %v702 = vadd.f32 %v339, %v701
      %703 = vmatmul.f32.gmra.mxu0 %v496
      %v704 = vpop.f32.mrf.mxu0
      %v705 = vadd.f32 %v339, %v704
      %706 = vmatmul.f32.gmra.mxu0 %v499
      %v707 = vpop.f32.mrf.mxu0
      %v708 = vadd.f32 %v339, %v707
      %709 = vmatmul.f32.gmra.mxu0 %v502
      %v710 = vpop.f32.mrf.mxu0
      %v711 = vadd.f32 %v339, %v710
      %712 = vmatmul.f32.gmra.mxu0 %v505
      %v713 = vpop.f32.mrf.mxu0
      %v714 = vadd.f32 %v339, %v713
      %715 = vmatmul.f32.gmra.mxu0 %v508
      %v716 = vpop.f32.mrf.mxu0
      %v717 = vadd.f32 %v339, %v716
      %718 = vmatmul.f32.gmra.mxu0 %v511
      %v719 = vpop.f32.mrf.mxu0
      %v720 = vadd.f32 %v339, %v719
      %721 = vmatmul.f32.gmra.mxu0 %v514
      %v722 = vpop.f32.mrf.mxu0
      %v723 = vadd.f32 %v339, %v722
      %724 = vmatmul.f32.gmra.mxu0 %v517
      %v725 = vpop.f32.mrf.mxu0
      %v726 = vadd.f32 %v339, %v725
      %727 = vmatmul.f32.gmra.mxu0 %v520
      %v728 = vpop.f32.mrf.mxu0
      %v729 = vadd.f32 %v339, %v728
      %730 = vmatmul.f32.gmra.mxu0 %v523
      %v731 = vpop.f32.mrf.mxu0
      %v732 = vadd.f32 %v339, %v731
      %733 = vmatmul.f32.gmra.mxu0 %v526
      %v734 = vpop.f32.mrf.mxu0
      %v735 = vadd.f32 %v339, %v734
      %736 = vmatmul.f32.gmra.mxu0 %v529
      %v737 = vpop.f32.mrf.mxu0
      %v738 = vadd.f32 %v339, %v737
      %739 = vmatmul.f32.gmra.mxu0 %v532
      %v740 = vpop.f32.mrf.mxu0
      %v741 = vadd.f32 %v339, %v740
      %742 = vdwg.mxu0
      %vm743 = vcmask 130048
      %744 = vst.msk [vmem:[%s261] sm:$0xff] %vm743, %v552
      %745 = vst.msk [vmem:[%s261 + $0x8] sm:$0xff] %vm743, %v555
      %746 = vst.msk [vmem:[%s261 + $0x10] sm:$0xff] %vm743, %v558
      %747 = vst.msk [vmem:[%s261 + $0x18] sm:$0xff] %vm743, %v561
      %748 = vst.msk [vmem:[%s261 + $0x20] sm:$0xff] %vm743, %v564
      %749 = vst.msk [vmem:[%s261 + $0x28] sm:$0xff] %vm743, %v567
      %750 = vst.msk [vmem:[%s261 + $0x30] sm:$0xff] %vm743, %v570
      %751 = vst.msk [vmem:[%s261 + $0x38] sm:$0xff] %vm743, %v573
      %752 = vst.msk [vmem:[%s261 + $0x40] sm:$0xff] %vm743, %v576
      %753 = vst.msk [vmem:[%s261 + $0x48] sm:$0xff] %vm743, %v579
      %754 = vst.msk [vmem:[%s261 + $0x50] sm:$0xff] %vm743, %v582
      %755 = vst.msk [vmem:[%s261 + $0x58] sm:$0xff] %vm743, %v585
      %756 = vst.msk [vmem:[%s261 + $0x60] sm:$0xff] %vm743, %v588
      %757 = vst.msk [vmem:[%s261 + $0x68] sm:$0xff] %vm743, %v591
      %758 = vst.msk [vmem:[%s261 + $0x70] sm:$0xff] %vm743, %v594
      %759 = vst.msk [vmem:[%s261 + $0x78] sm:$0xff] %vm743, %v597
      %760 = vst.msk [vmem:[%s261 + $0x80] sm:$0xff] %vm743, %v600
      %761 = vst.msk [vmem:[%s261 + $0x88] sm:$0xff] %vm743, %v603
      %762 = vst.msk [vmem:[%s261 + $0x90] sm:$0xff] %vm743, %v606
      %763 = vst.msk [vmem:[%s261 + $0x98] sm:$0xff] %vm743, %v609
      %764 = vst.msk [vmem:[%s261 + $0xa0] sm:$0xff] %vm743, %v612
      %765 = vst.msk [vmem:[%s261 + $0xa8] sm:$0xff] %vm743, %v615
      %766 = vst.msk [vmem:[%s261 + $0xb0] sm:$0xff] %vm743, %v618
      %767 = vst.msk [vmem:[%s261 + $0xb8] sm:$0xff] %vm743, %v621
      %768 = vst.msk [vmem:[%s261 + $0xc0] sm:$0xff] %vm743, %v624
      %769 = vst.msk [vmem:[%s261 + $0xc8] sm:$0xff] %vm743, %v627
      %770 = vst.msk [vmem:[%s261 + $0xd0] sm:$0xff] %vm743, %v630
      %771 = vst.msk [vmem:[%s261 + $0xd8] sm:$0xff] %vm743, %v633
      %772 = vst.msk [vmem:[%s261 + $0xe0] sm:$0xff] %vm743, %v636
      %773 = vst.msk [vmem:[%s261 + $0xe8] sm:$0xff] %vm743, %v639
      %774 = vst.msk [vmem:[%s261 + $0xf0] sm:$0xff] %vm743, %v642
      %775 = vst.msk [vmem:[%s261 + $0xf8] sm:$0xff] %vm743, %v645
      %776 = vst.msk [vmem:[%s261 + $0x100] sm:$0xff] %vm743, %v648
      %777 = vst.msk [vmem:[%s261 + $0x108] sm:$0xff] %vm743, %v651
      %778 = vst.msk [vmem:[%s261 + $0x110] sm:$0xff] %vm743, %v654
      %779 = vst.msk [vmem:[%s261 + $0x118] sm:$0xff] %vm743, %v657
      %780 = vst.msk [vmem:[%s261 + $0x120] sm:$0xff] %vm743, %v660
      %781 = vst.msk [vmem:[%s261 + $0x128] sm:$0xff] %vm743, %v663
      %782 = vst.msk [vmem:[%s261 + $0x130] sm:$0xff] %vm743, %v666
      %783 = vst.msk [vmem:[%s261 + $0x138] sm:$0xff] %vm743, %v669
      %784 = vst.msk [vmem:[%s261 + $0x140] sm:$0xff] %vm743, %v672
      %785 = vst.msk [vmem:[%s261 + $0x148] sm:$0xff] %vm743, %v675
      %786 = vst.msk [vmem:[%s261 + $0x150] sm:$0xff] %vm743, %v678
      %787 = vst.msk [vmem:[%s261 + $0x158] sm:$0xff] %vm743, %v681
      %788 = vst.msk [vmem:[%s261 + $0x160] sm:$0xff] %vm743, %v684
      %789 = vst.msk [vmem:[%s261 + $0x168] sm:$0xff] %vm743, %v687
      %790 = vst.msk [vmem:[%s261 + $0x170] sm:$0xff] %vm743, %v690
      %791 = vst.msk [vmem:[%s261 + $0x178] sm:$0xff] %vm743, %v693
      %792 = vst.msk [vmem:[%s261 + $0x180] sm:$0xff] %vm743, %v696
      %793 = vst.msk [vmem:[%s261 + $0x188] sm:$0xff] %vm743, %v699
      %794 = vst.msk [vmem:[%s261 + $0x190] sm:$0xff] %vm743, %v702
      %795 = vst.msk [vmem:[%s261 + $0x198] sm:$0xff] %vm743, %v705
      %796 = vst.msk [vmem:[%s261 + $0x1a0] sm:$0xff] %vm743, %v708
      %797 = vst.msk [vmem:[%s261 + $0x1a8] sm:$0xff] %vm743, %v711
      %798 = vst.msk [vmem:[%s261 + $0x1b0] sm:$0xff] %vm743, %v714
      %799 = vst.msk [vmem:[%s261 + $0x1b8] sm:$0xff] %vm743, %v717
      %800 = vst.msk [vmem:[%s261 + $0x1c0] sm:$0xff] %vm743, %v720
      %801 = vst.msk [vmem:[%s261 + $0x1c8] sm:$0xff] %vm743, %v723
      %802 = vst.msk [vmem:[%s261 + $0x1d0] sm:$0xff] %vm743, %v726
      %803 = vst.msk [vmem:[%s261 + $0x1d8] sm:$0xff] %vm743, %v729
      %804 = vst.msk [vmem:[%s261 + $0x1e0] sm:$0xff] %vm743, %v732
      %805 = vst.msk [vmem:[%s261 + $0x1e8] sm:$0xff] %vm743, %v735
      %806 = vst.msk [vmem:[%s261 + $0x1f0] sm:$0xff] %vm743, %v738
      %807 = vst.msk [vmem:[%s261 + $0x1f8] sm:$0xff] %vm743, %v741
      %v808 = vld [vmem:[%s3] sm:$0xff]
      %v809 = vld [vmem:[%s3 + $0x8] sm:$0xff]
      %v810 = vld [vmem:[%s3 + $0x10] sm:$0xff]
      %v811 = vld [vmem:[%s3 + $0x18] sm:$0xff]
      %v812 = vld [vmem:[%s4] sm:$0x1]
      %v814 = vperm.slane %v812, 0
      %816 = vmatpush.msra.mxu0 0.0
      %817 = vmatpush.msra.mxu0 0.0
      %818 = vmatpush.msra.mxu0 0.0
      %819 = vmatpush.msra.mxu0 0.0
      %820 = vmatpush.msra.mxu0 0.0
      %821 = vmatpush.msra.mxu0 0.0
      %822 = vmatpush.msra.mxu0 0.0
      %823 = vmatpush.msra.mxu0 0.0
      %824 = vmatpush.msra.mxu0 0.0
      %825 = vmatpush.msra.mxu0 0.0
      %826 = vmatpush.msra.mxu0 0.0
      %827 = vmatpush.msra.mxu0 0.0
      %828 = vmatpush.msra.mxu0 %v811
      %829 = vmatpush.msra.mxu0 %v810
      %830 = vmatpush.msra.mxu0 %v809
      %831 = vmatpush.msra.mxu0 %v808
      %832 = vmatmul.f32.gmra.mxu0 %v343
      %v833 = vpop.f32.mrf.mxu0
      %v834 = vadd.f32 %v814, %v833
      %835 = vmatmul.f32.gmra.mxu0 %v346
      %v836 = vpop.f32.mrf.mxu0
      %v837 = vadd.f32 %v814, %v836
      %838 = vmatmul.f32.gmra.mxu0 %v349
      %v839 = vpop.f32.mrf.mxu0
      %v840 = vadd.f32 %v814, %v839
      %841 = vmatmul.f32.gmra.mxu0 %v352
      %v842 = vpop.f32.mrf.mxu0
      %v843 = vadd.f32 %v814, %v842
      %844 = vmatmul.f32.gmra.mxu0 %v355
      %v845 = vpop.f32.mrf.mxu0
      %v846 = vadd.f32 %v814, %v845
      %847 = vmatmul.f32.gmra.mxu0 %v358
      %v848 = vpop.f32.mrf.mxu0
      %v849 = vadd.f32 %v814, %v848
      %850 = vmatmul.f32.gmra.mxu0 %v361
      %v851 = vpop.f32.mrf.mxu0
      %v852 = vadd.f32 %v814, %v851
      %853 = vmatmul.f32.gmra.mxu0 %v364
      %v854 = vpop.f32.mrf.mxu0
      %v855 = vadd.f32 %v814, %v854
      %856 = vmatmul.f32.gmra.mxu0 %v367
      %v857 = vpop.f32.mrf.mxu0
      %v858 = vadd.f32 %v814, %v857
      %859 = vmatmul.f32.gmra.mxu0 %v370
      %v860 = vpop.f32.mrf.mxu0
      %v861 = vadd.f32 %v814, %v860
      %862 = vmatmul.f32.gmra.mxu0 %v373
      %v863 = vpop.f32.mrf.mxu0
      %v864 = vadd.f32 %v814, %v863
      %865 = vmatmul.f32.gmra.mxu0 %v376
      %v866 = vpop.f32.mrf.mxu0
      %v867 = vadd.f32 %v814, %v866
      %868 = vmatmul.f32.gmra.mxu0 %v379
      %v869 = vpop.f32.mrf.mxu0
      %v870 = vadd.f32 %v814, %v869
      %871 = vmatmul.f32.gmra.mxu0 %v382
      %v872 = vpop.f32.mrf.mxu0
      %v873 = vadd.f32 %v814, %v872
      %874 = vmatmul.f32.gmra.mxu0 %v385
      %v875 = vpop.f32.mrf.mxu0
      %v876 = vadd.f32 %v814, %v875
      %877 = vmatmul.f32.gmra.mxu0 %v388
      %v878 = vpop.f32.mrf.mxu0
      %v879 = vadd.f32 %v814, %v878
      %880 = vmatmul.f32.gmra.mxu0 %v391
      %v881 = vpop.f32.mrf.mxu0
      %v882 = vadd.f32 %v814, %v881
      %883 = vmatmul.f32.gmra.mxu0 %v394
      %v884 = vpop.f32.mrf.mxu0
      %v885 = vadd.f32 %v814, %v884
      %886 = vmatmul.f32.gmra.mxu0 %v397
      %v887 = vpop.f32.mrf.mxu0
      %v888 = vadd.f32 %v814, %v887
      %889 = vmatmul.f32.gmra.mxu0 %v400
      %v890 = vpop.f32.mrf.mxu0
      %v891 = vadd.f32 %v814, %v890
      %892 = vmatmul.f32.gmra.mxu0 %v403
      %v893 = vpop.f32.mrf.mxu0
      %v894 = vadd.f32 %v814, %v893
      %895 = vmatmul.f32.gmra.mxu0 %v406
      %v896 = vpop.f32.mrf.mxu0
      %v897 = vadd.f32 %v814, %v896
      %898 = vmatmul.f32.gmra.mxu0 %v409
      %v899 = vpop.f32.mrf.mxu0
      %v900 = vadd.f32 %v814, %v899
      %901 = vmatmul.f32.gmra.mxu0 %v412
      %v902 = vpop.f32.mrf.mxu0
      %v903 = vadd.f32 %v814, %v902
      %904 = vmatmul.f32.gmra.mxu0 %v415
      %v905 = vpop.f32.mrf.mxu0
      %v906 = vadd.f32 %v814, %v905
      %907 = vmatmul.f32.gmra.mxu0 %v418
      %v908 = vpop.f32.mrf.mxu0
      %v909 = vadd.f32 %v814, %v908
      %910 = vmatmul.f32.gmra.mxu0 %v421
      %v911 = vpop.f32.mrf.mxu0
      %v912 = vadd.f32 %v814, %v911
      %913 = vmatmul.f32.gmra.mxu0 %v424
      %v914 = vpop.f32.mrf.mxu0
      %v915 = vadd.f32 %v814, %v914
      %916 = vmatmul.f32.gmra.mxu0 %v427
      %v917 = vpop.f32.mrf.mxu0
      %v918 = vadd.f32 %v814, %v917
      %919 = vmatmul.f32.gmra.mxu0 %v430
      %v920 = vpop.f32.mrf.mxu0
      %v921 = vadd.f32 %v814, %v920
      %922 = vmatmul.f32.gmra.mxu0 %v433
      %v923 = vpop.f32.mrf.mxu0
      %v924 = vadd.f32 %v814, %v923
      %925 = vmatmul.f32.gmra.mxu0 %v436
      %v926 = vpop.f32.mrf.mxu0
      %v927 = vadd.f32 %v814, %v926
      %928 = vmatmul.f32.gmra.mxu0 %v439
      %v929 = vpop.f32.mrf.mxu0
      %v930 = vadd.f32 %v814, %v929
      %931 = vmatmul.f32.gmra.mxu0 %v442
      %v932 = vpop.f32.mrf.mxu0
      %v933 = vadd.f32 %v814, %v932
      %934 = vmatmul.f32.gmra.mxu0 %v445
      %v935 = vpop.f32.mrf.mxu0
      %v936 = vadd.f32 %v814, %v935
      %937 = vmatmul.f32.gmra.mxu0 %v448
      %v938 = vpop.f32.mrf.mxu0
      %v939 = vadd.f32 %v814, %v938
      %940 = vmatmul.f32.gmra.mxu0 %v451
      %v941 = vpop.f32.mrf.mxu0
      %v942 = vadd.f32 %v814, %v941
      %943 = vmatmul.f32.gmra.mxu0 %v454
      %v944 = vpop.f32.mrf.mxu0
      %v945 = vadd.f32 %v814, %v944
      %946 = vmatmul.f32.gmra.mxu0 %v457
      %v947 = vpop.f32.mrf.mxu0
      %v948 = vadd.f32 %v814, %v947
      %949 = vmatmul.f32.gmra.mxu0 %v460
      %v950 = vpop.f32.mrf.mxu0
      %v951 = vadd.f32 %v814, %v950
      %952 = vmatmul.f32.gmra.mxu0 %v463
      %v953 = vpop.f32.mrf.mxu0
      %v954 = vadd.f32 %v814, %v953
      %955 = vmatmul.f32.gmra.mxu0 %v466
      %v956 = vpop.f32.mrf.mxu0
      %v957 = vadd.f32 %v814, %v956
      %958 = vmatmul.f32.gmra.mxu0 %v469
      %v959 = vpop.f32.mrf.mxu0
      %v960 = vadd.f32 %v814, %v959
      %961 = vmatmul.f32.gmra.mxu0 %v472
      %v962 = vpop.f32.mrf.mxu0
      %v963 = vadd.f32 %v814, %v962
      %964 = vmatmul.f32.gmra.mxu0 %v475
      %v965 = vpop.f32.mrf.mxu0
      %v966 = vadd.f32 %v814, %v965
      %967 = vmatmul.f32.gmra.mxu0 %v478
      %v968 = vpop.f32.mrf.mxu0
      %v969 = vadd.f32 %v814, %v968
      %970 = vmatmul.f32.gmra.mxu0 %v481
      %v971 = vpop.f32.mrf.mxu0
      %v972 = vadd.f32 %v814, %v971
      %973 = vmatmul.f32.gmra.mxu0 %v484
      %v974 = vpop.f32.mrf.mxu0
      %v975 = vadd.f32 %v814, %v974
      %976 = vmatmul.f32.gmra.mxu0 %v487
      %v977 = vpop.f32.mrf.mxu0
      %v978 = vadd.f32 %v814, %v977
      %979 = vmatmul.f32.gmra.mxu0 %v490
      %v980 = vpop.f32.mrf.mxu0
      %v981 = vadd.f32 %v814, %v980
      %982 = vmatmul.f32.gmra.mxu0 %v493
      %v983 = vpop.f32.mrf.mxu0
      %v984 = vadd.f32 %v814, %v983
      %985 = vmatmul.f32.gmra.mxu0 %v496
      %v986 = vpop.f32.mrf.mxu0
      %v987 = vadd.f32 %v814, %v986
      %988 = vmatmul.f32.gmra.mxu0 %v499
      %v989 = vpop.f32.mrf.mxu0
      %v990 = vadd.f32 %v814, %v989
      %991 = vmatmul.f32.gmra.mxu0 %v502
      %v992 = vpop.f32.mrf.mxu0
      %v993 = vadd.f32 %v814, %v992
      %994 = vmatmul.f32.gmra.mxu0 %v505
      %v995 = vpop.f32.mrf.mxu0
      %v996 = vadd.f32 %v814, %v995
      %997 = vmatmul.f32.gmra.mxu0 %v508
      %v998 = vpop.f32.mrf.mxu0
      %v999 = vadd.f32 %v814, %v998
      %1000 = vmatmul.f32.gmra.mxu0 %v511
      %v1001 = vpop.f32.mrf.mxu0
      %v1002 = vadd.f32 %v814, %v1001
      %1003 = vmatmul.f32.gmra.mxu0 %v514
      %v1004 = vpop.f32.mrf.mxu0
      %v1005 = vadd.f32 %v814, %v1004
      %1006 = vmatmul.f32.gmra.mxu0 %v517
      %v1007 = vpop.f32.mrf.mxu0
      %v1008 = vadd.f32 %v814, %v1007
      %1009 = vmatmul.f32.gmra.mxu0 %v520
      %v1010 = vpop.f32.mrf.mxu0
      %v1011 = vadd.f32 %v814, %v1010
      %1012 = vmatmul.f32.gmra.mxu0 %v523
      %v1013 = vpop.f32.mrf.mxu0
      %v1014 = vadd.f32 %v814, %v1013
      %1015 = vmatmul.f32.gmra.mxu0 %v526
      %v1016 = vpop.f32.mrf.mxu0
      %v1017 = vadd.f32 %v814, %v1016
      %1018 = vmatmul.f32.gmra.mxu0 %v529
      %v1019 = vpop.f32.mrf.mxu0
      %v1020 = vadd.f32 %v814, %v1019
      %1021 = vmatmul.f32.gmra.mxu0 %v532
      %v1022 = vpop.f32.mrf.mxu0
      %v1023 = vadd.f32 %v814, %v1022
      %1024 = vdwg.mxu0
      %v1025 = vmax.f32 %v834, 0.0
      %v1026 = vmax.f32 %v837, 0.0
      %v1027 = vmax.f32 %v840, 0.0
      %v1028 = vmax.f32 %v843, 0.0
      %v1029 = vmax.f32 %v846, 0.0
      %v1030 = vmax.f32 %v849, 0.0
      %v1031 = vmax.f32 %v852, 0.0
      %v1032 = vmax.f32 %v855, 0.0
      %v1033 = vmax.f32 %v858, 0.0
      %v1034 = vmax.f32 %v861, 0.0
      %v1035 = vmax.f32 %v864, 0.0
      %v1036 = vmax.f32 %v867, 0.0
      %v1037 = vmax.f32 %v870, 0.0
      %v1038 = vmax.f32 %v873, 0.0
      %v1039 = vmax.f32 %v876, 0.0
      %v1040 = vmax.f32 %v879, 0.0
      %v1041 = vmax.f32 %v882, 0.0
      %v1042 = vmax.f32 %v885, 0.0
      %v1043 = vmax.f32 %v888, 0.0
      %v1044 = vmax.f32 %v891, 0.0
      %v1045 = vmax.f32 %v894, 0.0
      %v1046 = vmax.f32 %v897, 0.0
      %v1047 = vmax.f32 %v900, 0.0
      %v1048 = vmax.f32 %v903, 0.0
      %v1049 = vmax.f32 %v906, 0.0
      %v1050 = vmax.f32 %v909, 0.0
      %v1051 = vmax.f32 %v912, 0.0
      %v1052 = vmax.f32 %v915, 0.0
      %v1053 = vmax.f32 %v918, 0.0
      %v1054 = vmax.f32 %v921, 0.0
      %v1055 = vmax.f32 %v924, 0.0
      %v1056 = vmax.f32 %v927, 0.0
      %v1057 = vmax.f32 %v930, 0.0
      %v1058 = vmax.f32 %v933, 0.0
      %v1059 = vmax.f32 %v936, 0.0
      %v1060 = vmax.f32 %v939, 0.0
      %v1061 = vmax.f32 %v942, 0.0
      %v1062 = vmax.f32 %v945, 0.0
      %v1063 = vmax.f32 %v948, 0.0
      %v1064 = vmax.f32 %v951, 0.0
      %v1065 = vmax.f32 %v954, 0.0
      %v1066 = vmax.f32 %v957, 0.0
      %v1067 = vmax.f32 %v960, 0.0
      %v1068 = vmax.f32 %v963, 0.0
      %v1069 = vmax.f32 %v966, 0.0
      %v1070 = vmax.f32 %v969, 0.0
      %v1071 = vmax.f32 %v972, 0.0
      %v1072 = vmax.f32 %v975, 0.0
      %v1073 = vmax.f32 %v978, 0.0
      %v1074 = vmax.f32 %v981, 0.0
      %v1075 = vmax.f32 %v984, 0.0
      %v1076 = vmax.f32 %v987, 0.0
      %v1077 = vmax.f32 %v990, 0.0
      %v1078 = vmax.f32 %v993, 0.0
      %v1079 = vmax.f32 %v996, 0.0
      %v1080 = vmax.f32 %v999, 0.0
      %v1081 = vmax.f32 %v1002, 0.0
      %v1082 = vmax.f32 %v1005, 0.0
      %v1083 = vmax.f32 %v1008, 0.0
      %v1084 = vmax.f32 %v1011, 0.0
      %v1085 = vmax.f32 %v1014, 0.0
      %v1086 = vmax.f32 %v1017, 0.0
      %v1087 = vmax.f32 %v1020, 0.0
      %v1088 = vmax.f32 %v1023, 0.0
      %vm1089 = vcmp.ne.f32.partialorder %v834, %v834
      %vm1090 = vcmp.ne.f32.partialorder %v837, %v837
      %vm1091 = vcmp.ne.f32.partialorder %v840, %v840
      %vm1092 = vcmp.ne.f32.partialorder %v843, %v843
      %vm1093 = vcmp.ne.f32.partialorder %v846, %v846
      %vm1094 = vcmp.ne.f32.partialorder %v849, %v849
      %vm1095 = vcmp.ne.f32.partialorder %v852, %v852
      %vm1096 = vcmp.ne.f32.partialorder %v855, %v855
      %vm1097 = vcmp.ne.f32.partialorder %v858, %v858
      %vm1098 = vcmp.ne.f32.partialorder %v861, %v861
      %vm1099 = vcmp.ne.f32.partialorder %v864, %v864
      %vm1100 = vcmp.ne.f32.partialorder %v867, %v867
      %vm1101 = vcmp.ne.f32.partialorder %v870, %v870
      %vm1102 = vcmp.ne.f32.partialorder %v873, %v873
      %vm1103 = vcmp.ne.f32.partialorder %v876, %v876
      %vm1104 = vcmp.ne.f32.partialorder %v879, %v879
      %vm1105 = vcmp.ne.f32.partialorder %v882, %v882
      %vm1106 = vcmp.ne.f32.partialorder %v885, %v885
      %vm1107 = vcmp.ne.f32.partialorder %v888, %v888
      %vm1108 = vcmp.ne.f32.partialorder %v891, %v891
      %vm1109 = vcmp.ne.f32.partialorder %v894, %v894
      %vm1110 = vcmp.ne.f32.partialorder %v897, %v897
      %vm1111 = vcmp.ne.f32.partialorder %v900, %v900
      %vm1112 = vcmp.ne.f32.partialorder %v903, %v903
      %vm1113 = vcmp.ne.f32.partialorder %v906, %v906
      %vm1114 = vcmp.ne.f32.partialorder %v909, %v909
      %vm1115 = vcmp.ne.f32.partialorder %v912, %v912
      %vm1116 = vcmp.ne.f32.partialorder %v915, %v915
      %vm1117 = vcmp.ne.f32.partialorder %v918, %v918
      %vm1118 = vcmp.ne.f32.partialorder %v921, %v921
      %vm1119 = vcmp.ne.f32.partialorder %v924, %v924
      %vm1120 = vcmp.ne.f32.partialorder %v927, %v927
      %vm1121 = vcmp.ne.f32.partialorder %v930, %v930
      %vm1122 = vcmp.ne.f32.partialorder %v933, %v933
      %vm1123 = vcmp.ne.f32.partialorder %v936, %v936
      %vm1124 = vcmp.ne.f32.partialorder %v939, %v939
      %vm1125 = vcmp.ne.f32.partialorder %v942, %v942
      %vm1126 = vcmp.ne.f32.partialorder %v945, %v945
      %vm1127 = vcmp.ne.f32.partialorder %v948, %v948
      %vm1128 = vcmp.ne.f32.partialorder %v951, %v951
      %vm1129 = vcmp.ne.f32.partialorder %v954, %v954
      %vm1130 = vcmp.ne.f32.partialorder %v957, %v957
      %vm1131 = vcmp.ne.f32.partialorder %v960, %v960
      %vm1132 = vcmp.ne.f32.partialorder %v963, %v963
      %vm1133 = vcmp.ne.f32.partialorder %v966, %v966
      %vm1134 = vcmp.ne.f32.partialorder %v969, %v969
      %vm1135 = vcmp.ne.f32.partialorder %v972, %v972
      %vm1136 = vcmp.ne.f32.partialorder %v975, %v975
      %vm1137 = vcmp.ne.f32.partialorder %v978, %v978
      %vm1138 = vcmp.ne.f32.partialorder %v981, %v981
      %vm1139 = vcmp.ne.f32.partialorder %v984, %v984
      %vm1140 = vcmp.ne.f32.partialorder %v987, %v987
      %vm1141 = vcmp.ne.f32.partialorder %v990, %v990
      %vm1142 = vcmp.ne.f32.partialorder %v993, %v993
      %vm1143 = vcmp.ne.f32.partialorder %v996, %v996
      %vm1144 = vcmp.ne.f32.partialorder %v999, %v999
      %vm1145 = vcmp.ne.f32.partialorder %v1002, %v1002
      %vm1146 = vcmp.ne.f32.partialorder %v1005, %v1005
      %vm1147 = vcmp.ne.f32.partialorder %v1008, %v1008
      %vm1148 = vcmp.ne.f32.partialorder %v1011, %v1011
      %vm1149 = vcmp.ne.f32.partialorder %v1014, %v1014
      %vm1150 = vcmp.ne.f32.partialorder %v1017, %v1017
      %vm1151 = vcmp.ne.f32.partialorder %v1020, %v1020
      %vm1152 = vcmp.ne.f32.partialorder %v1023, %v1023
      %v1153 = vadd.f32 %v834, 0.0
      %v1154 = vadd.f32 %v837, 0.0
      %v1155 = vadd.f32 %v840, 0.0
      %v1156 = vadd.f32 %v843, 0.0
      %v1157 = vadd.f32 %v846, 0.0
      %v1158 = vadd.f32 %v849, 0.0
      %v1159 = vadd.f32 %v852, 0.0
      %v1160 = vadd.f32 %v855, 0.0
      %v1161 = vadd.f32 %v858, 0.0
      %v1162 = vadd.f32 %v861, 0.0
      %v1163 = vadd.f32 %v864, 0.0
      %v1164 = vadd.f32 %v867, 0.0
      %v1165 = vadd.f32 %v870, 0.0
      %v1166 = vadd.f32 %v873, 0.0
      %v1167 = vadd.f32 %v876, 0.0
      %v1168 = vadd.f32 %v879, 0.0
      %v1169 = vadd.f32 %v882, 0.0
      %v1170 = vadd.f32 %v885, 0.0
      %v1171 = vadd.f32 %v888, 0.0
      %v1172 = vadd.f32 %v891, 0.0
      %v1173 = vadd.f32 %v894, 0.0
      %v1174 = vadd.f32 %v897, 0.0
      %v1175 = vadd.f32 %v900, 0.0
      %v1176 = vadd.f32 %v903, 0.0
      %v1177 = vadd.f32 %v906, 0.0
      %v1178 = vadd.f32 %v909, 0.0
      %v1179 = vadd.f32 %v912, 0.0
      %v1180 = vadd.f32 %v915, 0.0
      %v1181 = vadd.f32 %v918, 0.0
      %v1182 = vadd.f32 %v921, 0.0
      %v1183 = vadd.f32 %v924, 0.0
      %v1184 = vadd.f32 %v927, 0.0
      %v1185 = vadd.f32 %v930, 0.0
      %v1186 = vadd.f32 %v933, 0.0
      %v1187 = vadd.f32 %v936, 0.0
      %v1188 = vadd.f32 %v939, 0.0
      %v1189 = vadd.f32 %v942, 0.0
      %v1190 = vadd.f32 %v945, 0.0
      %v1191 = vadd.f32 %v948, 0.0
      %v1192 = vadd.f32 %v951, 0.0
      %v1193 = vadd.f32 %v954, 0.0
      %v1194 = vadd.f32 %v957, 0.0
      %v1195 = vadd.f32 %v960, 0.0
      %v1196 = vadd.f32 %v963, 0.0
      %v1197 = vadd.f32 %v966, 0.0
      %v1198 = vadd.f32 %v969, 0.0
      %v1199 = vadd.f32 %v972, 0.0
      %v1200 = vadd.f32 %v975, 0.0
      %v1201 = vadd.f32 %v978, 0.0
      %v1202 = vadd.f32 %v981, 0.0
      %v1203 = vadd.f32 %v984, 0.0
      %v1204 = vadd.f32 %v987, 0.0
      %v1205 = vadd.f32 %v990, 0.0
      %v1206 = vadd.f32 %v993, 0.0
      %v1207 = vadd.f32 %v996, 0.0
      %v1208 = vadd.f32 %v999, 0.0
      %v1209 = vadd.f32 %v1002, 0.0
      %v1210 = vadd.f32 %v1005, 0.0
      %v1211 = vadd.f32 %v1008, 0.0
      %v1212 = vadd.f32 %v1011, 0.0
      %v1213 = vadd.f32 %v1014, 0.0
      %v1214 = vadd.f32 %v1017, 0.0
      %v1215 = vadd.f32 %v1020, 0.0
      %v1216 = vadd.f32 %v1023, 0.0
      %v1217 = vand.u32 2147483647, %v834
      %v1218 = vand.u32 2147483647, %v837
      %v1219 = vand.u32 2147483647, %v840
      %v1220 = vand.u32 2147483647, %v843
      %v1221 = vand.u32 2147483647, %v846
      %v1222 = vand.u32 2147483647, %v849
      %v1223 = vand.u32 2147483647, %v852
      %v1224 = vand.u32 2147483647, %v855
      %v1225 = vand.u32 2147483647, %v858
      %v1226 = vand.u32 2147483647, %v861
      %v1227 = vand.u32 2147483647, %v864
      %v1228 = vand.u32 2147483647, %v867
      %v1229 = vand.u32 2147483647, %v870
      %v1230 = vand.u32 2147483647, %v873
      %v1231 = vand.u32 2147483647, %v876
      %v1232 = vand.u32 2147483647, %v879
      %v1233 = vand.u32 2147483647, %v882
      %v1234 = vand.u32 2147483647, %v885
      %v1235 = vand.u32 2147483647, %v888
      %v1236 = vand.u32 2147483647, %v891
      %v1237 = vand.u32 2147483647, %v894
      %v1238 = vand.u32 2147483647, %v897
      %v1239 = vand.u32 2147483647, %v900
      %v1240 = vand.u32 2147483647, %v903
      %v1241 = vand.u32 2147483647, %v906
      %v1242 = vand.u32 2147483647, %v909
      %v1243 = vand.u32 2147483647, %v912
      %v1244 = vand.u32 2147483647, %v915
      %v1245 = vand.u32 2147483647, %v918
      %v1246 = vand.u32 2147483647, %v921
      %v1247 = vand.u32 2147483647, %v924
      %v1248 = vand.u32 2147483647, %v927
      %v1249 = vand.u32 2147483647, %v930
      %v1250 = vand.u32 2147483647, %v933
      %v1251 = vand.u32 2147483647, %v936
      %v1252 = vand.u32 2147483647, %v939
      %v1253 = vand.u32 2147483647, %v942
      %v1254 = vand.u32 2147483647, %v945
      %v1255 = vand.u32 2147483647, %v948
      %v1256 = vand.u32 2147483647, %v951
      %v1257 = vand.u32 2147483647, %v954
      %v1258 = vand.u32 2147483647, %v957
      %v1259 = vand.u32 2147483647, %v960
      %v1260 = vand.u32 2147483647, %v963
      %v1261 = vand.u32 2147483647, %v966
      %v1262 = vand.u32 2147483647, %v969
      %v1263 = vand.u32 2147483647, %v972
      %v1264 = vand.u32 2147483647, %v975
      %v1265 = vand.u32 2147483647, %v978
      %v1266 = vand.u32 2147483647, %v981
      %v1267 = vand.u32 2147483647, %v984
      %v1268 = vand.u32 2147483647, %v987
      %v1269 = vand.u32 2147483647, %v990
      %v1270 = vand.u32 2147483647, %v993
      %v1271 = vand.u32 2147483647, %v996
      %v1272 = vand.u32 2147483647, %v999
      %v1273 = vand.u32 2147483647, %v1002
      %v1274 = vand.u32 2147483647, %v1005
      %v1275 = vand.u32 2147483647, %v1008
      %v1276 = vand.u32 2147483647, %v1011
      %v1277 = vand.u32 2147483647, %v1014
      %v1278 = vand.u32 2147483647, %v1017
      %v1279 = vand.u32 2147483647, %v1020
      %v1280 = vand.u32 2147483647, %v1023
      %v1281 = vsub.f32 0.0, %v1217
      %v1282 = vsub.f32 0.0, %v1218
      %v1283 = vsub.f32 0.0, %v1219
      %v1284 = vsub.f32 0.0, %v1220
      %v1285 = vsub.f32 0.0, %v1221
      %v1286 = vsub.f32 0.0, %v1222
      %v1287 = vsub.f32 0.0, %v1223
      %v1288 = vsub.f32 0.0, %v1224
      %v1289 = vsub.f32 0.0, %v1225
      %v1290 = vsub.f32 0.0, %v1226
      %v1291 = vsub.f32 0.0, %v1227
      %v1292 = vsub.f32 0.0, %v1228
      %v1293 = vsub.f32 0.0, %v1229
      %v1294 = vsub.f32 0.0, %v1230
      %v1295 = vsub.f32 0.0, %v1231
      %v1296 = vsub.f32 0.0, %v1232
      %v1297 = vsub.f32 0.0, %v1233
      %v1298 = vsub.f32 0.0, %v1234
      %v1299 = vsub.f32 0.0, %v1235
      %v1300 = vsub.f32 0.0, %v1236
      %v1301 = vsub.f32 0.0, %v1237
      %v1302 = vsub.f32 0.0, %v1238
      %v1303 = vsub.f32 0.0, %v1239
      %v1304 = vsub.f32 0.0, %v1240
      %v1305 = vsub.f32 0.0, %v1241
      %v1306 = vsub.f32 0.0, %v1242
      %v1307 = vsub.f32 0.0, %v1243
      %v1308 = vsub.f32 0.0, %v1244
      %v1309 = vsub.f32 0.0, %v1245
      %v1310 = vsub.f32 0.0, %v1246
      %v1311 = vsub.f32 0.0, %v1247
      %v1312 = vsub.f32 0.0, %v1248
      %v1313 = vsub.f32 0.0, %v1249
      %v1314 = vsub.f32 0.0, %v1250
      %v1315 = vsub.f32 0.0, %v1251
      %v1316 = vsub.f32 0.0, %v1252
      %v1317 = vsub.f32 0.0, %v1253
      %v1318 = vsub.f32 0.0, %v1254
      %v1319 = vsub.f32 0.0, %v1255
      %v1320 = vsub.f32 0.0, %v1256
      %v1321 = vsub.f32 0.0, %v1257
      %v1322 = vsub.f32 0.0, %v1258
      %v1323 = vsub.f32 0.0, %v1259
      %v1324 = vsub.f32 0.0, %v1260
      %v1325 = vsub.f32 0.0, %v1261
      %v1326 = vsub.f32 0.0, %v1262
      %v1327 = vsub.f32 0.0, %v1263
      %v1328 = vsub.f32 0.0, %v1264
      %v1329 = vsub.f32 0.0, %v1265
      %v1330 = vsub.f32 0.0, %v1266
      %v1331 = vsub.f32 0.0, %v1267
      %v1332 = vsub.f32 0.0, %v1268
      %v1333 = vsub.f32 0.0, %v1269
      %v1334 = vsub.f32 0.0, %v1270
      %v1335 = vsub.f32 0.0, %v1271
      %v1336 = vsub.f32 0.0, %v1272
      %v1337 = vsub.f32 0.0, %v1273
      %v1338 = vsub.f32 0.0, %v1274
      %v1339 = vsub.f32 0.0, %v1275
      %v1340 = vsub.f32 0.0, %v1276
      %v1341 = vsub.f32 0.0, %v1277
      %v1342 = vsub.f32 0.0, %v1278
      %v1343 = vsub.f32 0.0, %v1279
      %v1344 = vsub.f32 0.0, %v1280
      %v1345 = vmul.f32 %v1281, 1.442695
      %v1346 = vpow.pop %v1345
      %v1347 = vmul.f32 %v1282, 1.442695
      %v1348 = vpow.pop %v1347
      %v1349 = vmul.f32 %v1283, 1.442695
      %v1350 = vpow.pop %v1349
      %v1351 = vmul.f32 %v1284, 1.442695
      %v1352 = vpow.pop %v1351
      %v1353 = vmul.f32 %v1285, 1.442695
      %v1354 = vpow.pop %v1353
      %v1355 = vmul.f32 %v1286, 1.442695
      %v1356 = vpow.pop %v1355
      %v1357 = vmul.f32 %v1287, 1.442695
      %v1358 = vpow.pop %v1357
      %v1359 = vmul.f32 %v1288, 1.442695
      %v1360 = vpow.pop %v1359
      %v1361 = vmul.f32 %v1289, 1.442695
      %v1362 = vpow.pop %v1361
      %v1363 = vmul.f32 %v1290, 1.442695
      %v1364 = vpow.pop %v1363
      %v1365 = vmul.f32 %v1291, 1.442695
      %v1366 = vpow.pop %v1365
      %v1367 = vmul.f32 %v1292, 1.442695
      %v1368 = vpow.pop %v1367
      %v1369 = vmul.f32 %v1293, 1.442695
      %v1370 = vpow.pop %v1369
      %v1371 = vmul.f32 %v1294, 1.442695
      %v1372 = vpow.pop %v1371
      %v1373 = vmul.f32 %v1295, 1.442695
      %v1374 = vpow.pop %v1373
      %v1375 = vmul.f32 %v1296, 1.442695
      %v1376 = vpow.pop %v1375
      %v1377 = vmul.f32 %v1297, 1.442695
      %v1378 = vpow.pop %v1377
      %v1379 = vmul.f32 %v1298, 1.442695
      %v1380 = vpow.pop %v1379
      %v1381 = vmul.f32 %v1299, 1.442695
      %v1382 = vpow.pop %v1381
      %v1383 = vmul.f32 %v1300, 1.442695
      %v1384 = vpow.pop %v1383
      %v1385 = vmul.f32 %v1301, 1.442695
      %v1386 = vpow.pop %v1385
      %v1387 = vmul.f32 %v1302, 1.442695
      %v1388 = vpow.pop %v1387
      %v1389 = vmul.f32 %v1303, 1.442695
      %v1390 = vpow.pop %v1389
      %v1391 = vmul.f32 %v1304, 1.442695
      %v1392 = vpow.pop %v1391
      %v1393 = vmul.f32 %v1305, 1.442695
      %v1394 = vpow.pop %v1393
      %v1395 = vmul.f32 %v1306, 1.442695
      %v1396 = vpow.pop %v1395
      %v1397 = vmul.f32 %v1307, 1.442695
      %v1398 = vpow.pop %v1397
      %v1399 = vmul.f32 %v1308, 1.442695
      %v1400 = vpow.pop %v1399
      %v1401 = vmul.f32 %v1309, 1.442695
      %v1402 = vpow.pop %v1401
      %v1403 = vmul.f32 %v1310, 1.442695
      %v1404 = vpow.pop %v1403
      %v1405 = vmul.f32 %v1311, 1.442695
      %v1406 = vpow.pop %v1405
      %v1407 = vmul.f32 %v1312, 1.442695
      %v1408 = vpow.pop %v1407
      %v1409 = vmul.f32 %v1313, 1.442695
      %v1410 = vpow.pop %v1409
      %v1411 = vmul.f32 %v1314, 1.442695
      %v1412 = vpow.pop %v1411
      %v1413 = vmul.f32 %v1315, 1.442695
      %v1414 = vpow.pop %v1413
      %v1415 = vmul.f32 %v1316, 1.442695
      %v1416 = vpow.pop %v1415
      %v1417 = vmul.f32 %v1317, 1.442695
      %v1418 = vpow.pop %v1417
      %v1419 = vmul.f32 %v1318, 1.442695
      %v1420 = vpow.pop %v1419
      %v1421 = vmul.f32 %v1319, 1.442695
      %v1422 = vpow.pop %v1421
      %v1423 = vmul.f32 %v1320, 1.442695
      %v1424 = vpow.pop %v1423
      %v1425 = vmul.f32 %v1321, 1.442695
      %v1426 = vpow.pop %v1425
      %v1427 = vmul.f32 %v1322, 1.442695
      %v1428 = vpow.pop %v1427
      %v1429 = vmul.f32 %v1323, 1.442695
      %v1430 = vpow.pop %v1429
      %v1431 = vmul.f32 %v1324, 1.442695
      %v1432 = vpow.pop %v1431
      %v1433 = vmul.f32 %v1325, 1.442695
      %v1434 = vpow.pop %v1433
      %v1435 = vmul.f32 %v1326, 1.442695
      %v1436 = vpow.pop %v1435
      %v1437 = vmul.f32 %v1327, 1.442695
      %v1438 = vpow.pop %v1437
      %v1439 = vmul.f32 %v1328, 1.442695
      %v1440 = vpow.pop %v1439
      %v1441 = vmul.f32 %v1329, 1.442695
      %v1442 = vpow.pop %v1441
      %v1443 = vmul.f32 %v1330, 1.442695
      %v1444 = vpow.pop %v1443
      %v1445 = vmul.f32 %v1331, 1.442695
      %v1446 = vpow.pop %v1445
      %v1447 = vmul.f32 %v1332, 1.442695
      %v1448 = vpow.pop %v1447
      %v1449 = vmul.f32 %v1333, 1.442695
      %v1450 = vpow.pop %v1449
      %v1451 = vmul.f32 %v1334, 1.442695
      %v1452 = vpow.pop %v1451
      %v1453 = vmul.f32 %v1335, 1.442695
      %v1454 = vpow.pop %v1453
      %v1455 = vmul.f32 %v1336, 1.442695
      %v1456 = vpow.pop %v1455
      %v1457 = vmul.f32 %v1337, 1.442695
      %v1458 = vpow.pop %v1457
      %v1459 = vmul.f32 %v1338, 1.442695
      %v1460 = vpow.pop %v1459
      %v1461 = vmul.f32 %v1339, 1.442695
      %v1462 = vpow.pop %v1461
      %v1463 = vmul.f32 %v1340, 1.442695
      %v1464 = vpow.pop %v1463
      %v1465 = vmul.f32 %v1341, 1.442695
      %v1466 = vpow.pop %v1465
      %v1467 = vmul.f32 %v1342, 1.442695
      %v1468 = vpow.pop %v1467
      %v1469 = vmul.f32 %v1343, 1.442695
      %v1470 = vpow.pop %v1469
      %v1471 = vmul.f32 %v1344, 1.442695
      %v1472 = vpow.pop %v1471
      %v1473 = vadd.f32 %v1346, 1.0
      %v1474 = vlog2.pop %v1473
      %v1475 = vmul.f32 %v1474, 0.6931472
      %v1476 = vmul.f32 -0.5, %v1346
      %v1477 = vadd.f32 %v1476, 1.0
      %v1478 = vmul.f32 %v1477, %v1346
      %v1479 = vand.u32 2147483647, %v1346
      %vm1480 = vcmp.lt.f32.partialorder %v1479, 0.0004427343
      %v1481 = vsel %vm1480, %v1478, %v1475
      %v1482 = vadd.f32 %v1348, 1.0
      %v1483 = vlog2.pop %v1482
      %v1484 = vmul.f32 %v1483, 0.6931472
      %v1485 = vmul.f32 -0.5, %v1348
      %v1486 = vadd.f32 %v1485, 1.0
      %v1487 = vmul.f32 %v1486, %v1348
      %v1488 = vand.u32 2147483647, %v1348
      %vm1489 = vcmp.lt.f32.partialorder %v1488, 0.0004427343
      %v1490 = vsel %vm1489, %v1487, %v1484
      %v1491 = vadd.f32 %v1350, 1.0
      %v1492 = vlog2.pop %v1491
      %v1493 = vmul.f32 %v1492, 0.6931472
      %v1494 = vmul.f32 -0.5, %v1350
      %v1495 = vadd.f32 %v1494, 1.0
      %v1496 = vmul.f32 %v1495, %v1350
      %v1497 = vand.u32 2147483647, %v1350
      %vm1498 = vcmp.lt.f32.partialorder %v1497, 0.0004427343
      %v1499 = vsel %vm1498, %v1496, %v1493
      %v1500 = vadd.f32 %v1352, 1.0
      %v1501 = vlog2.pop %v1500
      %v1502 = vmul.f32 %v1501, 0.6931472
      %v1503 = vmul.f32 -0.5, %v1352
      %v1504 = vadd.f32 %v1503, 1.0
      %v1505 = vmul.f32 %v1504, %v1352
      %v1506 = vand.u32 2147483647, %v1352
      %vm1507 = vcmp.lt.f32.partialorder %v1506, 0.0004427343
      %v1508 = vsel %vm1507, %v1505, %v1502
      %v1509 = vadd.f32 %v1354, 1.0
      %v1510 = vlog2.pop %v1509
      %v1511 = vmul.f32 %v1510, 0.6931472
      %v1512 = vmul.f32 -0.5, %v1354
      %v1513 = vadd.f32 %v1512, 1.0
      %v1514 = vmul.f32 %v1513, %v1354
      %v1515 = vand.u32 2147483647, %v1354
      %vm1516 = vcmp.lt.f32.partialorder %v1515, 0.0004427343
      %v1517 = vsel %vm1516, %v1514, %v1511
      %v1518 = vadd.f32 %v1356, 1.0
      %v1519 = vlog2.pop %v1518
      %v1520 = vmul.f32 %v1519, 0.6931472
      %v1521 = vmul.f32 -0.5, %v1356
      %v1522 = vadd.f32 %v1521, 1.0
      %v1523 = vmul.f32 %v1522, %v1356
      %v1524 = vand.u32 2147483647, %v1356
      %vm1525 = vcmp.lt.f32.partialorder %v1524, 0.0004427343
      %v1526 = vsel %vm1525, %v1523, %v1520
      %v1527 = vadd.f32 %v1358, 1.0
      %v1528 = vlog2.pop %v1527
      %v1529 = vmul.f32 %v1528, 0.6931472
      %v1530 = vmul.f32 -0.5, %v1358
      %v1531 = vadd.f32 %v1530, 1.0
      %v1532 = vmul.f32 %v1531, %v1358
      %v1533 = vand.u32 2147483647, %v1358
      %vm1534 = vcmp.lt.f32.partialorder %v1533, 0.0004427343
      %v1535 = vsel %vm1534, %v1532, %v1529
      %v1536 = vadd.f32 %v1360, 1.0
      %v1537 = vlog2.pop %v1536
      %v1538 = vmul.f32 %v1537, 0.6931472
      %v1539 = vmul.f32 -0.5, %v1360
      %v1540 = vadd.f32 %v1539, 1.0
      %v1541 = vmul.f32 %v1540, %v1360
      %v1542 = vand.u32 2147483647, %v1360
      %vm1543 = vcmp.lt.f32.partialorder %v1542, 0.0004427343
      %v1544 = vsel %vm1543, %v1541, %v1538
      %v1545 = vadd.f32 %v1362, 1.0
      %v1546 = vlog2.pop %v1545
      %v1547 = vmul.f32 %v1546, 0.6931472
      %v1548 = vmul.f32 -0.5, %v1362
      %v1549 = vadd.f32 %v1548, 1.0
      %v1550 = vmul.f32 %v1549, %v1362
      %v1551 = vand.u32 2147483647, %v1362
      %vm1552 = vcmp.lt.f32.partialorder %v1551, 0.0004427343
      %v1553 = vsel %vm1552, %v1550, %v1547
      %v1554 = vadd.f32 %v1364, 1.0
      %v1555 = vlog2.pop %v1554
      %v1556 = vmul.f32 %v1555, 0.6931472
      %v1557 = vmul.f32 -0.5, %v1364
      %v1558 = vadd.f32 %v1557, 1.0
      %v1559 = vmul.f32 %v1558, %v1364
      %v1560 = vand.u32 2147483647, %v1364
      %vm1561 = vcmp.lt.f32.partialorder %v1560, 0.0004427343
      %v1562 = vsel %vm1561, %v1559, %v1556
      %v1563 = vadd.f32 %v1366, 1.0
      %v1564 = vlog2.pop %v1563
      %v1565 = vmul.f32 %v1564, 0.6931472
      %v1566 = vmul.f32 -0.5, %v1366
      %v1567 = vadd.f32 %v1566, 1.0
      %v1568 = vmul.f32 %v1567, %v1366
      %v1569 = vand.u32 2147483647, %v1366
      %vm1570 = vcmp.lt.f32.partialorder %v1569, 0.0004427343
      %v1571 = vsel %vm1570, %v1568, %v1565
      %v1572 = vadd.f32 %v1368, 1.0
      %v1573 = vlog2.pop %v1572
      %v1574 = vmul.f32 %v1573, 0.6931472
      %v1575 = vmul.f32 -0.5, %v1368
      %v1576 = vadd.f32 %v1575, 1.0
      %v1577 = vmul.f32 %v1576, %v1368
      %v1578 = vand.u32 2147483647, %v1368
      %vm1579 = vcmp.lt.f32.partialorder %v1578, 0.0004427343
      %v1580 = vsel %vm1579, %v1577, %v1574
      %v1581 = vadd.f32 %v1370, 1.0
      %v1582 = vlog2.pop %v1581
      %v1583 = vmul.f32 %v1582, 0.6931472
      %v1584 = vmul.f32 -0.5, %v1370
      %v1585 = vadd.f32 %v1584, 1.0
      %v1586 = vmul.f32 %v1585, %v1370
      %v1587 = vand.u32 2147483647, %v1370
      %vm1588 = vcmp.lt.f32.partialorder %v1587, 0.0004427343
      %v1589 = vsel %vm1588, %v1586, %v1583
      %v1590 = vadd.f32 %v1372, 1.0
      %v1591 = vlog2.pop %v1590
      %v1592 = vmul.f32 %v1591, 0.6931472
      %v1593 = vmul.f32 -0.5, %v1372
      %v1594 = vadd.f32 %v1593, 1.0
      %v1595 = vmul.f32 %v1594, %v1372
      %v1596 = vand.u32 2147483647, %v1372
      %vm1597 = vcmp.lt.f32.partialorder %v1596, 0.0004427343
      %v1598 = vsel %vm1597, %v1595, %v1592
      %v1599 = vadd.f32 %v1374, 1.0
      %v1600 = vlog2.pop %v1599
      %v1601 = vmul.f32 %v1600, 0.6931472
      %v1602 = vmul.f32 -0.5, %v1374
      %v1603 = vadd.f32 %v1602, 1.0
      %v1604 = vmul.f32 %v1603, %v1374
      %v1605 = vand.u32 2147483647, %v1374
      %vm1606 = vcmp.lt.f32.partialorder %v1605, 0.0004427343
      %v1607 = vsel %vm1606, %v1604, %v1601
      %v1608 = vadd.f32 %v1376, 1.0
      %v1609 = vlog2.pop %v1608
      %v1610 = vmul.f32 %v1609, 0.6931472
      %v1611 = vmul.f32 -0.5, %v1376
      %v1612 = vadd.f32 %v1611, 1.0
      %v1613 = vmul.f32 %v1612, %v1376
      %v1614 = vand.u32 2147483647, %v1376
      %vm1615 = vcmp.lt.f32.partialorder %v1614, 0.0004427343
      %v1616 = vsel %vm1615, %v1613, %v1610
      %v1617 = vadd.f32 %v1378, 1.0
      %v1618 = vlog2.pop %v1617
      %v1619 = vmul.f32 %v1618, 0.6931472
      %v1620 = vmul.f32 -0.5, %v1378
      %v1621 = vadd.f32 %v1620, 1.0
      %v1622 = vmul.f32 %v1621, %v1378
      %v1623 = vand.u32 2147483647, %v1378
      %vm1624 = vcmp.lt.f32.partialorder %v1623, 0.0004427343
      %v1625 = vsel %vm1624, %v1622, %v1619
      %v1626 = vadd.f32 %v1380, 1.0
      %v1627 = vlog2.pop %v1626
      %v1628 = vmul.f32 %v1627, 0.6931472
      %v1629 = vmul.f32 -0.5, %v1380
      %v1630 = vadd.f32 %v1629, 1.0
      %v1631 = vmul.f32 %v1630, %v1380
      %v1632 = vand.u32 2147483647, %v1380
      %vm1633 = vcmp.lt.f32.partialorder %v1632, 0.0004427343
      %v1634 = vsel %vm1633, %v1631, %v1628
      %v1635 = vadd.f32 %v1382, 1.0
      %v1636 = vlog2.pop %v1635
      %v1637 = vmul.f32 %v1636, 0.6931472
      %v1638 = vmul.f32 -0.5, %v1382
      %v1639 = vadd.f32 %v1638, 1.0
      %v1640 = vmul.f32 %v1639, %v1382
      %v1641 = vand.u32 2147483647, %v1382
      %vm1642 = vcmp.lt.f32.partialorder %v1641, 0.0004427343
      %v1643 = vsel %vm1642, %v1640, %v1637
      %v1644 = vadd.f32 %v1384, 1.0
      %v1645 = vlog2.pop %v1644
      %v1646 = vmul.f32 %v1645, 0.6931472
      %v1647 = vmul.f32 -0.5, %v1384
      %v1648 = vadd.f32 %v1647, 1.0
      %v1649 = vmul.f32 %v1648, %v1384
      %v1650 = vand.u32 2147483647, %v1384
      %vm1651 = vcmp.lt.f32.partialorder %v1650, 0.0004427343
      %v1652 = vsel %vm1651, %v1649, %v1646
      %v1653 = vadd.f32 %v1386, 1.0
      %v1654 = vlog2.pop %v1653
      %v1655 = vmul.f32 %v1654, 0.6931472
      %v1656 = vmul.f32 -0.5, %v1386
      %v1657 = vadd.f32 %v1656, 1.0
      %v1658 = vmul.f32 %v1657, %v1386
      %v1659 = vand.u32 2147483647, %v1386
      %vm1660 = vcmp.lt.f32.partialorder %v1659, 0.0004427343
      %v1661 = vsel %vm1660, %v1658, %v1655
      %v1662 = vadd.f32 %v1388, 1.0
      %v1663 = vlog2.pop %v1662
      %v1664 = vmul.f32 %v1663, 0.6931472
      %v1665 = vmul.f32 -0.5, %v1388
      %v1666 = vadd.f32 %v1665, 1.0
      %v1667 = vmul.f32 %v1666, %v1388
      %v1668 = vand.u32 2147483647, %v1388
      %vm1669 = vcmp.lt.f32.partialorder %v1668, 0.0004427343
      %v1670 = vsel %vm1669, %v1667, %v1664
      %v1671 = vadd.f32 %v1390, 1.0
      %v1672 = vlog2.pop %v1671
      %v1673 = vmul.f32 %v1672, 0.6931472
      %v1674 = vmul.f32 -0.5, %v1390
      %v1675 = vadd.f32 %v1674, 1.0
      %v1676 = vmul.f32 %v1675, %v1390
      %v1677 = vand.u32 2147483647, %v1390
      %vm1678 = vcmp.lt.f32.partialorder %v1677, 0.0004427343
      %v1679 = vsel %vm1678, %v1676, %v1673
      %v1680 = vadd.f32 %v1392, 1.0
      %v1681 = vlog2.pop %v1680
      %v1682 = vmul.f32 %v1681, 0.6931472
      %v1683 = vmul.f32 -0.5, %v1392
      %v1684 = vadd.f32 %v1683, 1.0
      %v1685 = vmul.f32 %v1684, %v1392
      %v1686 = vand.u32 2147483647, %v1392
      %vm1687 = vcmp.lt.f32.partialorder %v1686, 0.0004427343
      %v1688 = vsel %vm1687, %v1685, %v1682
      %v1689 = vadd.f32 %v1394, 1.0
      %v1690 = vlog2.pop %v1689
      %v1691 = vmul.f32 %v1690, 0.6931472
      %v1692 = vmul.f32 -0.5, %v1394
      %v1693 = vadd.f32 %v1692, 1.0
      %v1694 = vmul.f32 %v1693, %v1394
      %v1695 = vand.u32 2147483647, %v1394
      %vm1696 = vcmp.lt.f32.partialorder %v1695, 0.0004427343
      %v1697 = vsel %vm1696, %v1694, %v1691
      %v1698 = vadd.f32 %v1396, 1.0
      %v1699 = vlog2.pop %v1698
      %v1700 = vmul.f32 %v1699, 0.6931472
      %v1701 = vmul.f32 -0.5, %v1396
      %v1702 = vadd.f32 %v1701, 1.0
      %v1703 = vmul.f32 %v1702, %v1396
      %v1704 = vand.u32 2147483647, %v1396
      %vm1705 = vcmp.lt.f32.partialorder %v1704, 0.0004427343
      %v1706 = vsel %vm1705, %v1703, %v1700
      %v1707 = vadd.f32 %v1398, 1.0
      %v1708 = vlog2.pop %v1707
      %v1709 = vmul.f32 %v1708, 0.6931472
      %v1710 = vmul.f32 -0.5, %v1398
      %v1711 = vadd.f32 %v1710, 1.0
      %v1712 = vmul.f32 %v1711, %v1398
      %v1713 = vand.u32 2147483647, %v1398
      %vm1714 = vcmp.lt.f32.partialorder %v1713, 0.0004427343
      %v1715 = vsel %vm1714, %v1712, %v1709
      %v1716 = vadd.f32 %v1400, 1.0
      %v1717 = vlog2.pop %v1716
      %v1718 = vmul.f32 %v1717, 0.6931472
      %v1719 = vmul.f32 -0.5, %v1400
      %v1720 = vadd.f32 %v1719, 1.0
      %v1721 = vmul.f32 %v1720, %v1400
      %v1722 = vand.u32 2147483647, %v1400
      %vm1723 = vcmp.lt.f32.partialorder %v1722, 0.0004427343
      %v1724 = vsel %vm1723, %v1721, %v1718
      %v1725 = vadd.f32 %v1402, 1.0
      %v1726 = vlog2.pop %v1725
      %v1727 = vmul.f32 %v1726, 0.6931472
      %v1728 = vmul.f32 -0.5, %v1402
      %v1729 = vadd.f32 %v1728, 1.0
      %v1730 = vmul.f32 %v1729, %v1402
      %v1731 = vand.u32 2147483647, %v1402
      %vm1732 = vcmp.lt.f32.partialorder %v1731, 0.0004427343
      %v1733 = vsel %vm1732, %v1730, %v1727
      %v1734 = vadd.f32 %v1404, 1.0
      %v1735 = vlog2.pop %v1734
      %v1736 = vmul.f32 %v1735, 0.6931472
      %v1737 = vmul.f32 -0.5, %v1404
      %v1738 = vadd.f32 %v1737, 1.0
      %v1739 = vmul.f32 %v1738, %v1404
      %v1740 = vand.u32 2147483647, %v1404
      %vm1741 = vcmp.lt.f32.partialorder %v1740, 0.0004427343
      %v1742 = vsel %vm1741, %v1739, %v1736
      %v1743 = vadd.f32 %v1406, 1.0
      %v1744 = vlog2.pop %v1743
      %v1745 = vmul.f32 %v1744, 0.6931472
      %v1746 = vmul.f32 -0.5, %v1406
      %v1747 = vadd.f32 %v1746, 1.0
      %v1748 = vmul.f32 %v1747, %v1406
      %v1749 = vand.u32 2147483647, %v1406
      %vm1750 = vcmp.lt.f32.partialorder %v1749, 0.0004427343
      %v1751 = vsel %vm1750, %v1748, %v1745
      %v1752 = vadd.f32 %v1408, 1.0
      %v1753 = vlog2.pop %v1752
      %v1754 = vmul.f32 %v1753, 0.6931472
      %v1755 = vmul.f32 -0.5, %v1408
      %v1756 = vadd.f32 %v1755, 1.0
      %v1757 = vmul.f32 %v1756, %v1408
      %v1758 = vand.u32 2147483647, %v1408
      %vm1759 = vcmp.lt.f32.partialorder %v1758, 0.0004427343
      %v1760 = vsel %vm1759, %v1757, %v1754
      %v1761 = vadd.f32 %v1410, 1.0
      %v1762 = vlog2.pop %v1761
      %v1763 = vmul.f32 %v1762, 0.6931472
      %v1764 = vmul.f32 -0.5, %v1410
      %v1765 = vadd.f32 %v1764, 1.0
      %v1766 = vmul.f32 %v1765, %v1410
      %v1767 = vand.u32 2147483647, %v1410
      %vm1768 = vcmp.lt.f32.partialorder %v1767, 0.0004427343
      %v1769 = vsel %vm1768, %v1766, %v1763
      %v1770 = vadd.f32 %v1412, 1.0
      %v1771 = vlog2.pop %v1770
      %v1772 = vmul.f32 %v1771, 0.6931472
      %v1773 = vmul.f32 -0.5, %v1412
      %v1774 = vadd.f32 %v1773, 1.0
      %v1775 = vmul.f32 %v1774, %v1412
      %v1776 = vand.u32 2147483647, %v1412
      %vm1777 = vcmp.lt.f32.partialorder %v1776, 0.0004427343
      %v1778 = vsel %vm1777, %v1775, %v1772
      %v1779 = vadd.f32 %v1414, 1.0
      %v1780 = vlog2.pop %v1779
      %v1781 = vmul.f32 %v1780, 0.6931472
      %v1782 = vmul.f32 -0.5, %v1414
      %v1783 = vadd.f32 %v1782, 1.0
      %v1784 = vmul.f32 %v1783, %v1414
      %v1785 = vand.u32 2147483647, %v1414
      %vm1786 = vcmp.lt.f32.partialorder %v1785, 0.0004427343
      %v1787 = vsel %vm1786, %v1784, %v1781
      %v1788 = vadd.f32 %v1416, 1.0
      %v1789 = vlog2.pop %v1788
      %v1790 = vmul.f32 %v1789, 0.6931472
      %v1791 = vmul.f32 -0.5, %v1416
      %v1792 = vadd.f32 %v1791, 1.0
      %v1793 = vmul.f32 %v1792, %v1416
      %v1794 = vand.u32 2147483647, %v1416
      %vm1795 = vcmp.lt.f32.partialorder %v1794, 0.0004427343
      %v1796 = vsel %vm1795, %v1793, %v1790
      %v1797 = vadd.f32 %v1418, 1.0
      %v1798 = vlog2.pop %v1797
      %v1799 = vmul.f32 %v1798, 0.6931472
      %v1800 = vmul.f32 -0.5, %v1418
      %v1801 = vadd.f32 %v1800, 1.0
      %v1802 = vmul.f32 %v1801, %v1418
      %v1803 = vand.u32 2147483647, %v1418
      %vm1804 = vcmp.lt.f32.partialorder %v1803, 0.0004427343
      %v1805 = vsel %vm1804, %v1802, %v1799
      %v1806 = vadd.f32 %v1420, 1.0
      %v1807 = vlog2.pop %v1806
      %v1808 = vmul.f32 %v1807, 0.6931472
      %v1809 = vmul.f32 -0.5, %v1420
      %v1810 = vadd.f32 %v1809, 1.0
      %v1811 = vmul.f32 %v1810, %v1420
      %v1812 = vand.u32 2147483647, %v1420
      %vm1813 = vcmp.lt.f32.partialorder %v1812, 0.0004427343
      %v1814 = vsel %vm1813, %v1811, %v1808
      %v1815 = vadd.f32 %v1422, 1.0
      %v1816 = vlog2.pop %v1815
      %v1817 = vmul.f32 %v1816, 0.6931472
      %v1818 = vmul.f32 -0.5, %v1422
      %v1819 = vadd.f32 %v1818, 1.0
      %v1820 = vmul.f32 %v1819, %v1422
      %v1821 = vand.u32 2147483647, %v1422
      %vm1822 = vcmp.lt.f32.partialorder %v1821, 0.0004427343
      %v1823 = vsel %vm1822, %v1820, %v1817
      %v1824 = vadd.f32 %v1424, 1.0
      %v1825 = vlog2.pop %v1824
      %v1826 = vmul.f32 %v1825, 0.6931472
      %v1827 = vmul.f32 -0.5, %v1424
      %v1828 = vadd.f32 %v1827, 1.0
      %v1829 = vmul.f32 %v1828, %v1424
      %v1830 = vand.u32 2147483647, %v1424
      %vm1831 = vcmp.lt.f32.partialorder %v1830, 0.0004427343
      %v1832 = vsel %vm1831, %v1829, %v1826
      %v1833 = vadd.f32 %v1426, 1.0
      %v1834 = vlog2.pop %v1833
      %v1835 = vmul.f32 %v1834, 0.6931472
      %v1836 = vmul.f32 -0.5, %v1426
      %v1837 = vadd.f32 %v1836, 1.0
      %v1838 = vmul.f32 %v1837, %v1426
      %v1839 = vand.u32 2147483647, %v1426
      %vm1840 = vcmp.lt.f32.partialorder %v1839, 0.0004427343
      %v1841 = vsel %vm1840, %v1838, %v1835
      %v1842 = vadd.f32 %v1428, 1.0
      %v1843 = vlog2.pop %v1842
      %v1844 = vmul.f32 %v1843, 0.6931472
      %v1845 = vmul.f32 -0.5, %v1428
      %v1846 = vadd.f32 %v1845, 1.0
      %v1847 = vmul.f32 %v1846, %v1428
      %v1848 = vand.u32 2147483647, %v1428
      %vm1849 = vcmp.lt.f32.partialorder %v1848, 0.0004427343
      %v1850 = vsel %vm1849, %v1847, %v1844
      %v1851 = vadd.f32 %v1430, 1.0
      %v1852 = vlog2.pop %v1851
      %v1853 = vmul.f32 %v1852, 0.6931472
      %v1854 = vmul.f32 -0.5, %v1430
      %v1855 = vadd.f32 %v1854, 1.0
      %v1856 = vmul.f32 %v1855, %v1430
      %v1857 = vand.u32 2147483647, %v1430
      %vm1858 = vcmp.lt.f32.partialorder %v1857, 0.0004427343
      %v1859 = vsel %vm1858, %v1856, %v1853
      %v1860 = vadd.f32 %v1432, 1.0
      %v1861 = vlog2.pop %v1860
      %v1862 = vmul.f32 %v1861, 0.6931472
      %v1863 = vmul.f32 -0.5, %v1432
      %v1864 = vadd.f32 %v1863, 1.0
      %v1865 = vmul.f32 %v1864, %v1432
      %v1866 = vand.u32 2147483647, %v1432
      %vm1867 = vcmp.lt.f32.partialorder %v1866, 0.0004427343
      %v1868 = vsel %vm1867, %v1865, %v1862
      %v1869 = vadd.f32 %v1434, 1.0
      %v1870 = vlog2.pop %v1869
      %v1871 = vmul.f32 %v1870, 0.6931472
      %v1872 = vmul.f32 -0.5, %v1434
      %v1873 = vadd.f32 %v1872, 1.0
      %v1874 = vmul.f32 %v1873, %v1434
      %v1875 = vand.u32 2147483647, %v1434
      %vm1876 = vcmp.lt.f32.partialorder %v1875, 0.0004427343
      %v1877 = vsel %vm1876, %v1874, %v1871
      %v1878 = vadd.f32 %v1436, 1.0
      %v1879 = vlog2.pop %v1878
      %v1880 = vmul.f32 %v1879, 0.6931472
      %v1881 = vmul.f32 -0.5, %v1436
      %v1882 = vadd.f32 %v1881, 1.0
      %v1883 = vmul.f32 %v1882, %v1436
      %v1884 = vand.u32 2147483647, %v1436
      %vm1885 = vcmp.lt.f32.partialorder %v1884, 0.0004427343
      %v1886 = vsel %vm1885, %v1883, %v1880
      %v1887 = vadd.f32 %v1438, 1.0
      %v1888 = vlog2.pop %v1887
      %v1889 = vmul.f32 %v1888, 0.6931472
      %v1890 = vmul.f32 -0.5, %v1438
      %v1891 = vadd.f32 %v1890, 1.0
      %v1892 = vmul.f32 %v1891, %v1438
      %v1893 = vand.u32 2147483647, %v1438
      %vm1894 = vcmp.lt.f32.partialorder %v1893, 0.0004427343
      %v1895 = vsel %vm1894, %v1892, %v1889
      %v1896 = vadd.f32 %v1440, 1.0
      %v1897 = vlog2.pop %v1896
      %v1898 = vmul.f32 %v1897, 0.6931472
      %v1899 = vmul.f32 -0.5, %v1440
      %v1900 = vadd.f32 %v1899, 1.0
      %v1901 = vmul.f32 %v1900, %v1440
      %v1902 = vand.u32 2147483647, %v1440
      %vm1903 = vcmp.lt.f32.partialorder %v1902, 0.0004427343
      %v1904 = vsel %vm1903, %v1901, %v1898
      %v1905 = vadd.f32 %v1442, 1.0
      %v1906 = vlog2.pop %v1905
      %v1907 = vmul.f32 %v1906, 0.6931472
      %v1908 = vmul.f32 -0.5, %v1442
      %v1909 = vadd.f32 %v1908, 1.0
      %v1910 = vmul.f32 %v1909, %v1442
      %v1911 = vand.u32 2147483647, %v1442
      %vm1912 = vcmp.lt.f32.partialorder %v1911, 0.0004427343
      %v1913 = vsel %vm1912, %v1910, %v1907
      %v1914 = vadd.f32 %v1444, 1.0
      %v1915 = vlog2.pop %v1914
      %v1916 = vmul.f32 %v1915, 0.6931472
      %v1917 = vmul.f32 -0.5, %v1444
      %v1918 = vadd.f32 %v1917, 1.0
      %v1919 = vmul.f32 %v1918, %v1444
      %v1920 = vand.u32 2147483647, %v1444
      %vm1921 = vcmp.lt.f32.partialorder %v1920, 0.0004427343
      %v1922 = vsel %vm1921, %v1919, %v1916
      %v1923 = vadd.f32 %v1446, 1.0
      %v1924 = vlog2.pop %v1923
      %v1925 = vmul.f32 %v1924, 0.6931472
      %v1926 = vmul.f32 -0.5, %v1446
      %v1927 = vadd.f32 %v1926, 1.0
      %v1928 = vmul.f32 %v1927, %v1446
      %v1929 = vand.u32 2147483647, %v1446
      %vm1930 = vcmp.lt.f32.partialorder %v1929, 0.0004427343
      %v1931 = vsel %vm1930, %v1928, %v1925
      %v1932 = vadd.f32 %v1448, 1.0
      %v1933 = vlog2.pop %v1932
      %v1934 = vmul.f32 %v1933, 0.6931472
      %v1935 = vmul.f32 -0.5, %v1448
      %v1936 = vadd.f32 %v1935, 1.0
      %v1937 = vmul.f32 %v1936, %v1448
      %v1938 = vand.u32 2147483647, %v1448
      %vm1939 = vcmp.lt.f32.partialorder %v1938, 0.0004427343
      %v1940 = vsel %vm1939, %v1937, %v1934
      %v1941 = vadd.f32 %v1450, 1.0
      %v1942 = vlog2.pop %v1941
      %v1943 = vmul.f32 %v1942, 0.6931472
      %v1944 = vmul.f32 -0.5, %v1450
      %v1945 = vadd.f32 %v1944, 1.0
      %v1946 = vmul.f32 %v1945, %v1450
      %v1947 = vand.u32 2147483647, %v1450
      %vm1948 = vcmp.lt.f32.partialorder %v1947, 0.0004427343
      %v1949 = vsel %vm1948, %v1946, %v1943
      %v1950 = vadd.f32 %v1452, 1.0
      %v1951 = vlog2.pop %v1950
      %v1952 = vmul.f32 %v1951, 0.6931472
      %v1953 = vmul.f32 -0.5, %v1452
      %v1954 = vadd.f32 %v1953, 1.0
      %v1955 = vmul.f32 %v1954, %v1452
      %v1956 = vand.u32 2147483647, %v1452
      %vm1957 = vcmp.lt.f32.partialorder %v1956, 0.0004427343
      %v1958 = vsel %vm1957, %v1955, %v1952
      %v1959 = vadd.f32 %v1454, 1.0
      %v1960 = vlog2.pop %v1959
      %v1961 = vmul.f32 %v1960, 0.6931472
      %v1962 = vmul.f32 -0.5, %v1454
      %v1963 = vadd.f32 %v1962, 1.0
      %v1964 = vmul.f32 %v1963, %v1454
      %v1965 = vand.u32 2147483647, %v1454
      %vm1966 = vcmp.lt.f32.partialorder %v1965, 0.0004427343
      %v1967 = vsel %vm1966, %v1964, %v1961
      %v1968 = vadd.f32 %v1456, 1.0
      %v1969 = vlog2.pop %v1968
      %v1970 = vmul.f32 %v1969, 0.6931472
      %v1971 = vmul.f32 -0.5, %v1456
      %v1972 = vadd.f32 %v1971, 1.0
      %v1973 = vmul.f32 %v1972, %v1456
      %v1974 = vand.u32 2147483647, %v1456
      %vm1975 = vcmp.lt.f32.partialorder %v1974, 0.0004427343
      %v1976 = vsel %vm1975, %v1973, %v1970
      %v1977 = vadd.f32 %v1458, 1.0
      %v1978 = vlog2.pop %v1977
      %v1979 = vmul.f32 %v1978, 0.6931472
      %v1980 = vmul.f32 -0.5, %v1458
      %v1981 = vadd.f32 %v1980, 1.0
      %v1982 = vmul.f32 %v1981, %v1458
      %v1983 = vand.u32 2147483647, %v1458
      %vm1984 = vcmp.lt.f32.partialorder %v1983, 0.0004427343
      %v1985 = vsel %vm1984, %v1982, %v1979
      %v1986 = vadd.f32 %v1460, 1.0
      %v1987 = vlog2.pop %v1986
      %v1988 = vmul.f32 %v1987, 0.6931472
      %v1989 = vmul.f32 -0.5, %v1460
      %v1990 = vadd.f32 %v1989, 1.0
      %v1991 = vmul.f32 %v1990, %v1460
      %v1992 = vand.u32 2147483647, %v1460
      %vm1993 = vcmp.lt.f32.partialorder %v1992, 0.0004427343
      %v1994 = vsel %vm1993, %v1991, %v1988
      %v1995 = vadd.f32 %v1462, 1.0
      %v1996 = vlog2.pop %v1995
      %v1997 = vmul.f32 %v1996, 0.6931472
      %v1998 = vmul.f32 -0.5, %v1462
      %v1999 = vadd.f32 %v1998, 1.0
      %v2000 = vmul.f32 %v1999, %v1462
      %v2001 = vand.u32 2147483647, %v1462
      %vm2002 = vcmp.lt.f32.partialorder %v2001, 0.0004427343
      %v2003 = vsel %vm2002, %v2000, %v1997
      %v2004 = vadd.f32 %v1464, 1.0
      %v2005 = vlog2.pop %v2004
      %v2006 = vmul.f32 %v2005, 0.6931472
      %v2007 = vmul.f32 -0.5, %v1464
      %v2008 = vadd.f32 %v2007, 1.0
      %v2009 = vmul.f32 %v2008, %v1464
      %v2010 = vand.u32 2147483647, %v1464
      %vm2011 = vcmp.lt.f32.partialorder %v2010, 0.0004427343
      %v2012 = vsel %vm2011, %v2009, %v2006
      %v2013 = vadd.f32 %v1466, 1.0
      %v2014 = vlog2.pop %v2013
      %v2015 = vmul.f32 %v2014, 0.6931472
      %v2016 = vmul.f32 -0.5, %v1466
      %v2017 = vadd.f32 %v2016, 1.0
      %v2018 = vmul.f32 %v2017, %v1466
      %v2019 = vand.u32 2147483647, %v1466
      %vm2020 = vcmp.lt.f32.partialorder %v2019, 0.0004427343
      %v2021 = vsel %vm2020, %v2018, %v2015
      %v2022 = vadd.f32 %v1468, 1.0
      %v2023 = vlog2.pop %v2022
      %v2024 = vmul.f32 %v2023, 0.6931472
      %v2025 = vmul.f32 -0.5, %v1468
      %v2026 = vadd.f32 %v2025, 1.0
      %v2027 = vmul.f32 %v2026, %v1468
      %v2028 = vand.u32 2147483647, %v1468
      %vm2029 = vcmp.lt.f32.partialorder %v2028, 0.0004427343
      %v2030 = vsel %vm2029, %v2027, %v2024
      %v2031 = vadd.f32 %v1470, 1.0
      %v2032 = vlog2.pop %v2031
      %v2033 = vmul.f32 %v2032, 0.6931472
      %v2034 = vmul.f32 -0.5, %v1470
      %v2035 = vadd.f32 %v2034, 1.0
      %v2036 = vmul.f32 %v2035, %v1470
      %v2037 = vand.u32 2147483647, %v1470
      %vm2038 = vcmp.lt.f32.partialorder %v2037, 0.0004427343
      %v2039 = vsel %vm2038, %v2036, %v2033
      %v2040 = vadd.f32 %v1472, 1.0
      %v2041 = vlog2.pop %v2040
      %v2042 = vmul.f32 %v2041, 0.6931472
      %v2043 = vmul.f32 -0.5, %v1472
      %v2044 = vadd.f32 %v2043, 1.0
      %v2045 = vmul.f32 %v2044, %v1472
      %v2046 = vand.u32 2147483647, %v1472
      %vm2047 = vcmp.lt.f32.partialorder %v2046, 0.0004427343
      %v2048 = vsel %vm2047, %v2045, %v2042
      %v2049 = vadd.f32 %v1025, %v1481
      %v2050 = vadd.f32 %v1026, %v1490
      %v2051 = vadd.f32 %v1027, %v1499
      %v2052 = vadd.f32 %v1028, %v1508
      %v2053 = vadd.f32 %v1029, %v1517
      %v2054 = vadd.f32 %v1030, %v1526
      %v2055 = vadd.f32 %v1031, %v1535
      %v2056 = vadd.f32 %v1032, %v1544
      %v2057 = vadd.f32 %v1033, %v1553
      %v2058 = vadd.f32 %v1034, %v1562
      %v2059 = vadd.f32 %v1035, %v1571
      %v2060 = vadd.f32 %v1036, %v1580
      %v2061 = vadd.f32 %v1037, %v1589
      %v2062 = vadd.f32 %v1038, %v1598
      %v2063 = vadd.f32 %v1039, %v1607
      %v2064 = vadd.f32 %v1040, %v1616
      %v2065 = vadd.f32 %v1041, %v1625
      %v2066 = vadd.f32 %v1042, %v1634
      %v2067 = vadd.f32 %v1043, %v1643
      %v2068 = vadd.f32 %v1044, %v1652
      %v2069 = vadd.f32 %v1045, %v1661
      %v2070 = vadd.f32 %v1046, %v1670
      %v2071 = vadd.f32 %v1047, %v1679
      %v2072 = vadd.f32 %v1048, %v1688
      %v2073 = vadd.f32 %v1049, %v1697
      %v2074 = vadd.f32 %v1050, %v1706
      %v2075 = vadd.f32 %v1051, %v1715
      %v2076 = vadd.f32 %v1052, %v1724
      %v2077 = vadd.f32 %v1053, %v1733
      %v2078 = vadd.f32 %v1054, %v1742
      %v2079 = vadd.f32 %v1055, %v1751
      %v2080 = vadd.f32 %v1056, %v1760
      %v2081 = vadd.f32 %v1057, %v1769
      %v2082 = vadd.f32 %v1058, %v1778
      %v2083 = vadd.f32 %v1059, %v1787
      %v2084 = vadd.f32 %v1060, %v1796
      %v2085 = vadd.f32 %v1061, %v1805
      %v2086 = vadd.f32 %v1062, %v1814
      %v2087 = vadd.f32 %v1063, %v1823
      %v2088 = vadd.f32 %v1064, %v1832
      %v2089 = vadd.f32 %v1065, %v1841
      %v2090 = vadd.f32 %v1066, %v1850
      %v2091 = vadd.f32 %v1067, %v1859
      %v2092 = vadd.f32 %v1068, %v1868
      %v2093 = vadd.f32 %v1069, %v1877
      %v2094 = vadd.f32 %v1070, %v1886
      %v2095 = vadd.f32 %v1071, %v1895
      %v2096 = vadd.f32 %v1072, %v1904
      %v2097 = vadd.f32 %v1073, %v1913
      %v2098 = vadd.f32 %v1074, %v1922
      %v2099 = vadd.f32 %v1075, %v1931
      %v2100 = vadd.f32 %v1076, %v1940
      %v2101 = vadd.f32 %v1077, %v1949
      %v2102 = vadd.f32 %v1078, %v1958
      %v2103 = vadd.f32 %v1079, %v1967
      %v2104 = vadd.f32 %v1080, %v1976
      %v2105 = vadd.f32 %v1081, %v1985
      %v2106 = vadd.f32 %v1082, %v1994
      %v2107 = vadd.f32 %v1083, %v2003
      %v2108 = vadd.f32 %v1084, %v2012
      %v2109 = vadd.f32 %v1085, %v2021
      %v2110 = vadd.f32 %v1086, %v2030
      %v2111 = vadd.f32 %v1087, %v2039
      %v2112 = vadd.f32 %v1088, %v2048
      %v2113 = vsel %vm1089, %v1153, %v2049
      %v2114 = vsel %vm1090, %v1154, %v2050
      %v2115 = vsel %vm1091, %v1155, %v2051
      %v2116 = vsel %vm1092, %v1156, %v2052
      %v2117 = vsel %vm1093, %v1157, %v2053
      %v2118 = vsel %vm1094, %v1158, %v2054
      %v2119 = vsel %vm1095, %v1159, %v2055
      %v2120 = vsel %vm1096, %v1160, %v2056
      %v2121 = vsel %vm1097, %v1161, %v2057
      %v2122 = vsel %vm1098, %v1162, %v2058
      %v2123 = vsel %vm1099, %v1163, %v2059
      %v2124 = vsel %vm1100, %v1164, %v2060
      %v2125 = vsel %vm1101, %v1165, %v2061
      %v2126 = vsel %vm1102, %v1166, %v2062
      %v2127 = vsel %vm1103, %v1167, %v2063
      %v2128 = vsel %vm1104, %v1168, %v2064
      %v2129 = vsel %vm1105, %v1169, %v2065
      %v2130 = vsel %vm1106, %v1170, %v2066
      %v2131 = vsel %vm1107, %v1171, %v2067
      %v2132 = vsel %vm1108, %v1172, %v2068
      %v2133 = vsel %vm1109, %v1173, %v2069
      %v2134 = vsel %vm1110, %v1174, %v2070
      %v2135 = vsel %vm1111, %v1175, %v2071
      %v2136 = vsel %vm1112, %v1176, %v2072
      %v2137 = vsel %vm1113, %v1177, %v2073
      %v2138 = vsel %vm1114, %v1178, %v2074
      %v2139 = vsel %vm1115, %v1179, %v2075
      %v2140 = vsel %vm1116, %v1180, %v2076
      %v2141 = vsel %vm1117, %v1181, %v2077
      %v2142 = vsel %vm1118, %v1182, %v2078
      %v2143 = vsel %vm1119, %v1183, %v2079
      %v2144 = vsel %vm1120, %v1184, %v2080
      %v2145 = vsel %vm1121, %v1185, %v2081
      %v2146 = vsel %vm1122, %v1186, %v2082
      %v2147 = vsel %vm1123, %v1187, %v2083
      %v2148 = vsel %vm1124, %v1188, %v2084
      %v2149 = vsel %vm1125, %v1189, %v2085
      %v2150 = vsel %vm1126, %v1190, %v2086
      %v2151 = vsel %vm1127, %v1191, %v2087
      %v2152 = vsel %vm1128, %v1192, %v2088
      %v2153 = vsel %vm1129, %v1193, %v2089
      %v2154 = vsel %vm1130, %v1194, %v2090
      %v2155 = vsel %vm1131, %v1195, %v2091
      %v2156 = vsel %vm1132, %v1196, %v2092
      %v2157 = vsel %vm1133, %v1197, %v2093
      %v2158 = vsel %vm1134, %v1198, %v2094
      %v2159 = vsel %vm1135, %v1199, %v2095
      %v2160 = vsel %vm1136, %v1200, %v2096
      %v2161 = vsel %vm1137, %v1201, %v2097
      %v2162 = vsel %vm1138, %v1202, %v2098
      %v2163 = vsel %vm1139, %v1203, %v2099
      %v2164 = vsel %vm1140, %v1204, %v2100
      %v2165 = vsel %vm1141, %v1205, %v2101
      %v2166 = vsel %vm1142, %v1206, %v2102
      %v2167 = vsel %vm1143, %v1207, %v2103
      %v2168 = vsel %vm1144, %v1208, %v2104
      %v2169 = vsel %vm1145, %v1209, %v2105
      %v2170 = vsel %vm1146, %v1210, %v2106
      %v2171 = vsel %vm1147, %v1211, %v2107
      %v2172 = vsel %vm1148, %v1212, %v2108
      %v2173 = vsel %vm1149, %v1213, %v2109
      %v2174 = vsel %vm1150, %v1214, %v2110
      %v2175 = vsel %vm1151, %v1215, %v2111
      %v2176 = vsel %vm1152, %v1216, %v2112
      %2177 = vst.msk [vmem:[%s267] sm:$0xff] %vm743, %v2113
      %2178 = vst.msk [vmem:[%s267 + $0x8] sm:$0xff] %vm743, %v2114
      %2179 = vst.msk [vmem:[%s267 + $0x10] sm:$0xff] %vm743, %v2115
      %2180 = vst.msk [vmem:[%s267 + $0x18] sm:$0xff] %vm743, %v2116
      %2181 = vst.msk [vmem:[%s267 + $0x20] sm:$0xff] %vm743, %v2117
      %2182 = vst.msk [vmem:[%s267 + $0x28] sm:$0xff] %vm743, %v2118
      %2183 = vst.msk [vmem:[%s267 + $0x30] sm:$0xff] %vm743, %v2119
      %2184 = vst.msk [vmem:[%s267 + $0x38] sm:$0xff] %vm743, %v2120
      %2185 = vst.msk [vmem:[%s267 + $0x40] sm:$0xff] %vm743, %v2121
      %2186 = vst.msk [vmem:[%s267 + $0x48] sm:$0xff] %vm743, %v2122
      %2187 = vst.msk [vmem:[%s267 + $0x50] sm:$0xff] %vm743, %v2123
      %2188 = vst.msk [vmem:[%s267 + $0x58] sm:$0xff] %vm743, %v2124
      %2189 = vst.msk [vmem:[%s267 + $0x60] sm:$0xff] %vm743, %v2125
      %2190 = vst.msk [vmem:[%s267 + $0x68] sm:$0xff] %vm743, %v2126
      %2191 = vst.msk [vmem:[%s267 + $0x70] sm:$0xff] %vm743, %v2127
      %2192 = vst.msk [vmem:[%s267 + $0x78] sm:$0xff] %vm743, %v2128
      %2193 = vst.msk [vmem:[%s267 + $0x80] sm:$0xff] %vm743, %v2129
      %2194 = vst.msk [vmem:[%s267 + $0x88] sm:$0xff] %vm743, %v2130
      %2195 = vst.msk [vmem:[%s267 + $0x90] sm:$0xff] %vm743, %v2131
      %2196 = vst.msk [vmem:[%s267 + $0x98] sm:$0xff] %vm743, %v2132
      %2197 = vst.msk [vmem:[%s267 + $0xa0] sm:$0xff] %vm743, %v2133
      %2198 = vst.msk [vmem:[%s267 + $0xa8] sm:$0xff] %vm743, %v2134
      %2199 = vst.msk [vmem:[%s267 + $0xb0] sm:$0xff] %vm743, %v2135
      %2200 = vst.msk [vmem:[%s267 + $0xb8] sm:$0xff] %vm743, %v2136
      %2201 = vst.msk [vmem:[%s267 + $0xc0] sm:$0xff] %vm743, %v2137
      %2202 = vst.msk [vmem:[%s267 + $0xc8] sm:$0xff] %vm743, %v2138
      %2203 = vst.msk [vmem:[%s267 + $0xd0] sm:$0xff] %vm743, %v2139
      %2204 = vst.msk [vmem:[%s267 + $0xd8] sm:$0xff] %vm743, %v2140
      %2205 = vst.msk [vmem:[%s267 + $0xe0] sm:$0xff] %vm743, %v2141
      %2206 = vst.msk [vmem:[%s267 + $0xe8] sm:$0xff] %vm743, %v2142
      %2207 = vst.msk [vmem:[%s267 + $0xf0] sm:$0xff] %vm743, %v2143
      %2208 = vst.msk [vmem:[%s267 + $0xf8] sm:$0xff] %vm743, %v2144
      %2209 = vst.msk [vmem:[%s267 + $0x100] sm:$0xff] %vm743, %v2145
      %2210 = vst.msk [vmem:[%s267 + $0x108] sm:$0xff] %vm743, %v2146
      %2211 = vst.msk [vmem:[%s267 + $0x110] sm:$0xff] %vm743, %v2147
      %2212 = vst.msk [vmem:[%s267 + $0x118] sm:$0xff] %vm743, %v2148
      %2213 = vst.msk [vmem:[%s267 + $0x120] sm:$0xff] %vm743, %v2149
      %2214 = vst.msk [vmem:[%s267 + $0x128] sm:$0xff] %vm743, %v2150
      %2215 = vst.msk [vmem:[%s267 + $0x130] sm:$0xff] %vm743, %v2151
      %2216 = vst.msk [vmem:[%s267 + $0x138] sm:$0xff] %vm743, %v2152
      %2217 = vst.msk [vmem:[%s267 + $0x140] sm:$0xff] %vm743, %v2153
      %2218 = vst.msk [vmem:[%s267 + $0x148] sm:$0xff] %vm743, %v2154
      %2219 = vst.msk [vmem:[%s267 + $0x150] sm:$0xff] %vm743, %v2155
      %2220 = vst.msk [vmem:[%s267 + $0x158] sm:$0xff] %vm743, %v2156
      %2221 = vst.msk [vmem:[%s267 + $0x160] sm:$0xff] %vm743, %v2157
      %2222 = vst.msk [vmem:[%s267 + $0x168] sm:$0xff] %vm743, %v2158
      %2223 = vst.msk [vmem:[%s267 + $0x170] sm:$0xff] %vm743, %v2159
      %2224 = vst.msk [vmem:[%s267 + $0x178] sm:$0xff] %vm743, %v2160
      %2225 = vst.msk [vmem:[%s267 + $0x180] sm:$0xff] %vm743, %v2161
      %2226 = vst.msk [vmem:[%s267 + $0x188] sm:$0xff] %vm743, %v2162
      %2227 = vst.msk [vmem:[%s267 + $0x190] sm:$0xff] %vm743, %v2163
      %2228 = vst.msk [vmem:[%s267 + $0x198] sm:$0xff] %vm743, %v2164
      %2229 = vst.msk [vmem:[%s267 + $0x1a0] sm:$0xff] %vm743, %v2165
      %2230 = vst.msk [vmem:[%s267 + $0x1a8] sm:$0xff] %vm743, %v2166
      %2231 = vst.msk [vmem:[%s267 + $0x1b0] sm:$0xff] %vm743, %v2167
      %2232 = vst.msk [vmem:[%s267 + $0x1b8] sm:$0xff] %vm743, %v2168
      %2233 = vst.msk [vmem:[%s267 + $0x1c0] sm:$0xff] %vm743, %v2169
      %2234 = vst.msk [vmem:[%s267 + $0x1c8] sm:$0xff] %vm743, %v2170
      %2235 = vst.msk [vmem:[%s267 + $0x1d0] sm:$0xff] %vm743, %v2171
      %2236 = vst.msk [vmem:[%s267 + $0x1d8] sm:$0xff] %vm743, %v2172
      %2237 = vst.msk [vmem:[%s267 + $0x1e0] sm:$0xff] %vm743, %v2173
      %2238 = vst.msk [vmem:[%s267 + $0x1e8] sm:$0xff] %vm743, %v2174
      %2239 = vst.msk [vmem:[%s267 + $0x1f0] sm:$0xff] %vm743, %v2175
      %2240 = vst.msk [vmem:[%s267 + $0x1f8] sm:$0xff] %vm743, %v2176
      %s2241 = smul.u32 64, %s18
      %p2242 = scmp.lt.s32.totalorder %s2241, 255
      %s2243 = scalar_select %p2242, %s2241, 255
      %s2244 = smul.addr %s2243, 8
      %s2245 = scalar_lea.vmem %s5, %s2244
      %s2246 = smul.u32 64, %s18
      %p2247 = scmp.lt.s32.totalorder %s2246, 255
      %s2248 = scalar_select %p2247, %s2246, 255
      %s2249 = smul.addr %s2248, 8
      %s2250 = scalar_lea.vmem %s6, %s2249
      // Predicated region
      $region41: #{tpu_custom_call.1} parent=39 // pred_check
        %p2251 = pneg %p146
      $region42: #{tpu_custom_call.1} parent=39 // pred_check_branch
        %2253 = sbr.rel (%p2251) target = $region44
      $region43: #{tpu_custom_call.1} parent=39 // pred_region
        %s2254 = smul.u32 64, %s18
      $region44: #{tpu_custom_call.1} parent=39 // pred_fallthru
        _
      // Predicated region
      $region45: #{tpu_custom_call.1} parent=39 // pred_check
        %p2255 = pneg %p172
      $region46: #{tpu_custom_call.1} parent=39 // pred_check_branch
        %2257 = sbr.rel (%p2255) target = $region48
      $region47: #{tpu_custom_call.1} parent=39 // pred_region
        %s2258 = smul.u32 64, %s18
      $region48: #{tpu_custom_call.1} parent=39 // pred_fallthru
        _
    $region40: #{tpu_custom_call.1} parent=5 // pred_fallthru
      _
    %p2259 = scmp.le.s32.totalorder 2, %s13
    // Predicated region
    $region49: #{tpu_custom_call.1} parent=5 // pred_check
      %p2260 = pneg %p2259
    $region50: #{tpu_custom_call.1} parent=5 // pred_check_branch
      %2262 = sbr.rel (%p2260) target = $region52
    $region51: #{tpu_custom_call.1} parent=5 // pred_region
      %s2263 = ssub.s32 %s13, 2
      // Predicated region
      $region53: #{tpu_custom_call.1} parent=51 // pred_check
        %p2264 = pneg %p152
      $region54: #{tpu_custom_call.1} parent=51 // pred_check_branch
        %2266 = sbr.rel (%p2264) target = $region56
      $region55: #{tpu_custom_call.1} parent=51 // pred_region
        %s2267 = smul.u32 64, %s19
        %p2268 = scmp.lt.s32.totalorder %s2267, 255
        %s2269 = scalar_select %p2268, %s2267, 255
        %s2270 = smul.addr %s2269, 8
        %s2271 = scalar_lea.vmem %s5, %s2270
      $region56: #{tpu_custom_call.1} parent=51 // pred_fallthru
        _
      // Predicated region
      $region57: #{tpu_custom_call.1} parent=51 // pred_check
        %p2272 = pneg %p178
      $region58: #{tpu_custom_call.1} parent=51 // pred_check_branch
        %2274 = sbr.rel (%p2272) target = $region60
      $region59: #{tpu_custom_call.1} parent=51 // pred_region
        %s2275 = smul.u32 64, %s19
        %p2276 = scmp.lt.s32.totalorder %s2275, 255
        %s2277 = scalar_select %p2276, %s2275, 255
        %s2278 = smul.addr %s2277, 8
        %s2279 = scalar_lea.vmem %s6, %s2278
      $region60: #{tpu_custom_call.1} parent=51 // pred_fallthru
        _
    $region52: #{tpu_custom_call.1} parent=5 // pred_fallthru
      _
  $region6: #{tpu_custom_call.1} parent=0 // loop_footer
    %s17 = sadd.s32 1, %s13
  $region7: #{tpu_custom_call.1} parent=0 // loop_footer_branch
    %12 = sbr.rel target = $region3
  $region8: #{tpu_custom_call.1} parent=0 // loop_exit
    _

</llo_original>
